<compile_context>
chip_gen: v5e
topology: v5e:2x2
jax: 0.10.0
libtpu: 0.0.40
codegen_flags: <defaults>
</compile_context>

<pallas_src>
import jax
import jax.numpy as jnp
import numpy as np
from jax.experimental import pallas as pl
from jax.experimental.pallas import tpu as pltpu

NODE_SIZE = 33          # fixed by nn.BatchNorm1d(33)
BATCH = 2
IN_FEATS = 64           # fixed by GC1(in_features=64)
BN_ROWS = BATCH * NODE_SIZE

# GraphConvolution (in_features, out_features) per layer.
DIMS = [(64, 128), (128, 256), (256, 512), (512, 256), (256, 128), (128, 64)]

# --- packed bf16 weight slab -------------------------------------------------
# One (768, 512) bf16 buffer; every sub-block starts at a row offset that is a
# multiple of 16 and a column offset that is a multiple of 128 -> clean layouts.
W_SLAB_ROWS, W_SLAB_COLS = 768, 512
W_OFFSETS = [(384, 384),   # w1 (64, 128)
             (256, 256),   # w2 (128, 256)
             (0,   0),     # w3 (256, 512)
             (256, 0),     # w4 (512, 256)
             (384, 256),   # w5 (256, 128)
             (448, 384)]   # w6 (128, 64)

# --- packed bias row ---------------------------------------------------------
B_WIDTHS = [d[1] for d in DIMS]
B_OFFSETS = [0]
for _w in B_WIDTHS[:-1]:
    B_OFFSETS.append(B_OFFSETS[-1] + _w)
B_TOTAL = B_OFFSETS[-1] + B_WIDTHS[-1]          # 1344


def pf_gcn_kernel(x_ref, dad_ref, w_ref, b_ref, gamma_ref, beta_ref, o_ref):
    dad = dad_ref[...]                                    # (BN_ROWS, BN_ROWS) bf16

    def weight(i):
        fi, fo = DIMS[i]
        r0, c0 = W_OFFSETS[i]
        return w_ref[r0:r0 + fi, c0:c0 + fo]              # bf16 (fi, fo)

    def bias(i):
        o = B_OFFSETS[i]
        return b_ref[:, o:o + DIMS[i][1]]                 # f32 (1, fo)

    def gc(h, i, dad_first):
        """GraphConvolution: DAD @ (h @ W) + b, with DAD applied on the side
        that sees the narrower feature width.  bf16 MXU operands, f32 acc."""
        hb = h.astype(jnp.bfloat16)
        w = weight(i)
        if dad_first:                                     # DAD at width Fin
            t = jnp.dot(dad, hb, preferred_element_type=jnp.float32)
            z = jnp.dot(t.astype(jnp.bfloat16), w,
                        preferred_element_type=jnp.float32)
        else:                                             # DAD at width Fout
            t = jnp.dot(hb, w, preferred_element_type=jnp.float32)
            z = jnp.dot(dad, t.astype(jnp.bfloat16),
                        preferred_element_type=jnp.float32)
        return z + bias(i)                                # f32 (BN_ROWS, fo)

    h = x_ref[...]                                        # (BN_ROWS, 64) f32
    h = jax.nn.relu(gc(h, 0, dad_first=True))             # (BN_ROWS, 128)
    h = jax.nn.relu(gc(h, 1, dad_first=True))             # (BN_ROWS, 256)
    h = jax.nn.relu(gc(h, 2, dad_first=True))             # (BN_ROWS, 512)

    # --- BatchNorm1d(NODE_SIZE), training mode: per-node stats over (B, F) ---
    # Rows are batch-major (b * N + n); the per-node batch sum is row n plus
    # row n + N.  Lane reduction + static sublane slice/add/concat, all f32.
    inv_count = 1.0 / (BATCH * DIMS[2][1])                # 1 / (B * 512)

    rs = jnp.sum(h, axis=-1, keepdims=True)               # (BN, 1)
    rp = rs[0:NODE_SIZE, :] + rs[NODE_SIZE:BN_ROWS, :]    # (N, 1)
    mean = jnp.concatenate([rp, rp], axis=0) * inv_count  # (BN, 1)
    d = h - mean
    sq = jnp.sum(d * d, axis=-1, keepdims=True)           # (BN, 1)
    sp = sq[0:NODE_SIZE, :] + sq[NODE_SIZE:BN_ROWS, :]
    var = jnp.concatenate([sp, sp], axis=0) * inv_count   # biased variance
    h = d * jax.lax.rsqrt(var + 1e-5) * gamma_ref[...] + beta_ref[...]

    h = jax.nn.relu(gc(h, 3, dad_first=False))            # (BN_ROWS, 256)
    h = jax.nn.relu(gc(h, 4, dad_first=False))            # (BN_ROWS, 128)
    o_ref[...] = jax.nn.sigmoid(gc(h, 5, dad_first=False))  # (BN_ROWS, 64)


def pf_gcn_forward(x, dad, weights, biases, gamma, beta):
    B, N, fin = x.shape
    assert (B, N) == (BATCH, NODE_SIZE) and fin == IN_FEATS

    # Packed bf16 weight slab (rounding matches w.astype(bf16)).
    slab = jnp.zeros((W_SLAB_ROWS, W_SLAB_COLS), jnp.float32)
    for w, (r0, c0) in zip(weights, W_OFFSETS):
        slab = slab.at[r0:r0 + w.shape[0], c0:c0 + w.shape[1]].set(w)
    slab = slab.astype(jnp.bfloat16)

    # Packed biases: (1, 1344) f32.
    bias_row = jnp.concatenate(biases, axis=1)

    # Block-diagonal DAD (B*N, B*N), bf16 MXU operand.
    dad_block = jnp.kron(jnp.eye(B, dtype=jnp.float32), dad).astype(jnp.bfloat16)

    # Per-row BatchNorm affine params, tiled across the batch: (B*N, 1) f32.
    gamma_col = jnp.tile(gamma, (B, 1))
    beta_col = jnp.tile(beta, (B, 1))

    vmem = pl.BlockSpec(memory_space=pltpu.MemorySpace.VMEM)
    out2d = pl.pallas_call(
        pf_gcn_kernel,
        out_shape=jax.ShapeDtypeStruct((B * N, DIMS[-1][1]), jnp.float32),
        in_specs=[vmem] * 6,
        out_specs=vmem,
    )(x.reshape(B * N, fin), dad_block, slab, bias_row, gamma_col, beta_col)
    return out2d.reshape(B, N, DIMS[-1][1])


# ----------------------------- references -----------------------------------
def pf_gcn_reference_f32(x, dad, weights, biases, gamma, beta):
    """Original-precision (f32) reference of the module forward."""
    def gc(h, w, b):
        s = jnp.einsum('bnf,fg->bng', h, w)
        return jnp.einsum('nm,bmg->bng', dad, s) + b[None]

    h = jax.nn.relu(gc(x, weights[0], biases[0]))
    h = jax.nn.relu(gc(h, weights[1], biases[1]))
    h = jax.nn.relu(gc(h, weights[2], biases[2]))
    mean = jnp.mean(h, axis=(0, 2), keepdims=True)
    var = jnp.mean((h - mean) ** 2, axis=(0, 2), keepdims=True)
    h = (h - mean) / jnp.sqrt(var + 1e-5)
    h = h * gamma[None] + beta[None]
    h = jax.nn.relu(gc(h, weights[3], biases[3]))
    h = jax.nn.relu(gc(h, weights[4], biases[4]))
    return jax.nn.sigmoid(gc(h, weights[5], biases[5]))


def pf_gcn_reference_bf16(x, dad, weights, biases, gamma, beta):
    """Pure-JAX reference matching the kernel's precision policy (bf16 MXU
    operands, f32 accumulation, f32 elementwise) and per-layer matmul order."""
    dad_bf = dad.astype(jnp.bfloat16)

    def gc(h, w, b, dad_first):
        hb = h.astype(jnp.bfloat16)
        wb = w.astype(jnp.bfloat16)
        if dad_first:
            t = jnp.einsum('nm,bmf->bnf', dad_bf, hb,
                           preferred_element_type=jnp.float32).astype(jnp.bfloat16)
            z = jnp.einsum('bnf,fg->bng', t, wb,
                           preferred_element_type=jnp.float32)
        else:
            t = jnp.einsum('bnf,fg->bng', hb, wb,
                           preferred_element_type=jnp.float32).astype(jnp.bfloat16)
            z = jnp.einsum('nm,bmg->bng', dad_bf, t,
                           preferred_element_type=jnp.float32)
        return z + b[None]

    h = jax.nn.relu(gc(x, weights[0], biases[0], True))
    h = jax.nn.relu(gc(h, weights[1], biases[1], True))
    h = jax.nn.relu(gc(h, weights[2], biases[2], True))
    mean = jnp.mean(h, axis=(0, 2), keepdims=True)
    var = jnp.mean((h - mean) ** 2, axis=(0, 2), keepdims=True)
    h = (h - mean) * jax.lax.rsqrt(var + 1e-5)
    h = h * gamma[None] + beta[None]
    h = jax.nn.relu(gc(h, weights[3], biases[3], False))
    h = jax.nn.relu(gc(h, weights[4], biases[4], False))
    return jax.nn.sigmoid(gc(h, weights[5], biases[5], False))


# ----------------------------- param builders --------------------------------
def make_params(key, node_size):
    weights, biases = [], []
    for (fi, fo) in DIMS:
        key, kw, kb = jax.random.split(key, 3)
        stdv = 1.0 / np.sqrt(fo)
        weights.append(jax.random.uniform(kw, (fi, fo), jnp.float32, -stdv, stdv))
        biases.append(jax.random.uniform(kb, (1, fo), jnp.float32, -stdv, stdv))
    gamma = jnp.ones((node_size, 1), jnp.float32)    # BatchNorm1d(33) weight
    beta = jnp.zeros((node_size, 1), jnp.float32)    # BatchNorm1d(33) bias
    return weights, biases, gamma, beta, key


def make_dad(node_size):
    # Deterministic normalized adjacency: ring graph + self-loops,
    # DAD = D^{-1/2} (A + I) D^{-1/2}.
    idx = np.arange(node_size)
    A = np.eye(node_size, dtype=np.float32)
    A[idx, (idx + 1) % node_size] = 1.0
    A[(idx + 1) % node_size, idx] = 1.0
    deg = A.sum(axis=1)
    dinv = 1.0 / np.sqrt(deg)
    return jnp.asarray(A * dinv[:, None] * dinv[None, :])


if __name__ == "__main__":
    key = jax.random.PRNGKey(0)
    weights, biases, gamma, beta, key = make_params(key, NODE_SIZE)
    dad = make_dad(NODE_SIZE)

    key, kx = jax.random.split(key)
    x = jax.random.normal(kx, (BATCH, NODE_SIZE, IN_FEATS), jnp.float32)

    out = pf_gcn_forward(x, dad, weights, biases, gamma, beta)
    out = jax.block_until_ready(out)
    assert out.shape == (BATCH, NODE_SIZE, DIMS[-1][1]), out.shape

    # Tight check vs. a precision-matched (bf16-operand) reference.
    ref_bf16 = jax.block_until_ready(
        pf_gcn_reference_bf16(x, dad, weights, biases, gamma, beta))
    np.testing.assert_allclose(np.asarray(out), np.asarray(ref_bf16),
                               rtol=2e-3, atol=2e-3)

    # Loose sanity check vs. the full-f32 module semantics (sigmoid outputs).
    ref_f32 = jax.block_until_ready(
        pf_gcn_reference_f32(x, dad, weights, biases, gamma, beta))
    np.testing.assert_allclose(np.asarray(out), np.asarray(ref_f32),
                               rtol=5e-2, atol=5e-2)

    print("KERNEL_OK")
</pallas_src>

<mosaic_0001>
module attributes {stable_mosaic.version = 11 : i64} {
  func.func @pf_gcn_kernel(%arg0: memref<66x64xf32, #tpu.memory_space<vmem>>, %arg1: memref<66x66xbf16, #tpu.memory_space<vmem>>, %arg2: memref<768x512xbf16, #tpu.memory_space<vmem>>, %arg3: memref<1x1344xf32, #tpu.memory_space<vmem>>, %arg4: memref<66x1xf32, #tpu.memory_space<vmem>>, %arg5: memref<66x1xf32, #tpu.memory_space<vmem>>, %arg6: memref<66x64xf32, #tpu.memory_space<vmem>>) attributes {dimension_semantics = [], scalar_prefetch = 0 : i64, scratch_operands = 0 : i64, tpu.core_type = #tpu.core_type<tc>} {
    %c0 = arith.constant 0 : index
    %c0_0 = arith.constant 0 : index
    %0 = vector.load %arg1[%c0, %c0_0] : memref<66x66xbf16, #tpu.memory_space<vmem>>, vector<66x66xbf16>
    %c0_1 = arith.constant 0 : index
    %c0_2 = arith.constant 0 : index
    %1 = vector.load %arg0[%c0_1, %c0_2] : memref<66x64xf32, #tpu.memory_space<vmem>>, vector<66x64xf32>
    %2 = arith.truncf %1 : vector<66x64xf32> to vector<66x64xbf16>
    %c384 = arith.constant 384 : index
    %c384_3 = arith.constant 384 : index
    %3 = vector.load %arg2[%c384, %c384_3] : memref<768x512xbf16, #tpu.memory_space<vmem>>, vector<64x128xbf16>
    %cst = arith.constant dense<0.000000e+00> : vector<66x64xf32>
    %4 = tpu.matmul %0, %2, %cst {dimension_numbers = #tpu.dot_dimension_numbers<[1], [0], [0], [1], [0, 0, 1, 1], [], []>} : vector<66x66xbf16>, vector<66x64xbf16>, vector<66x64xf32> -> vector<66x64xf32>
    %5 = arith.truncf %4 : vector<66x64xf32> to vector<66x64xbf16>
    %cst_4 = arith.constant dense<0.000000e+00> : vector<66x128xf32>
    %6 = tpu.matmul %5, %3, %cst_4 {dimension_numbers = #tpu.dot_dimension_numbers<[1], [0], [0], [1], [0, 0, 1, 1], [], []>} : vector<66x64xbf16>, vector<64x128xbf16>, vector<66x128xf32> -> vector<66x128xf32>
    %c0_5 = arith.constant 0 : index
    %c0_6 = arith.constant 0 : index
    %7 = vector.load %arg3[%c0_5, %c0_6] : memref<1x1344xf32, #tpu.memory_space<vmem>>, vector<1x128xf32>
    %8 = vector.broadcast %7 : vector<1x128xf32> to vector<66x128xf32>
    %9 = arith.addf %6, %8 : vector<66x128xf32>
    %cst_7 = arith.constant 0.000000e+00 : f32
    %10 = vector.broadcast %cst_7 : f32 to vector<66x128xf32>
    %11 = arith.maximumf %9, %10 : vector<66x128xf32>
    %12 = arith.truncf %11 : vector<66x128xf32> to vector<66x128xbf16>
    %c256 = arith.constant 256 : index
    %c256_8 = arith.constant 256 : index
    %13 = vector.load %arg2[%c256, %c256_8] : memref<768x512xbf16, #tpu.memory_space<vmem>>, vector<128x256xbf16>
    %cst_9 = arith.constant dense<0.000000e+00> : vector<66x128xf32>
    %14 = tpu.matmul %0, %12, %cst_9 {dimension_numbers = #tpu.dot_dimension_numbers<[1], [0], [0], [1], [0, 0, 1, 1], [], []>} : vector<66x66xbf16>, vector<66x128xbf16>, vector<66x128xf32> -> vector<66x128xf32>
    %15 = arith.truncf %14 : vector<66x128xf32> to vector<66x128xbf16>
    %cst_10 = arith.constant dense<0.000000e+00> : vector<66x256xf32>
    %16 = tpu.matmul %15, %13, %cst_10 {dimension_numbers = #tpu.dot_dimension_numbers<[1], [0], [0], [1], [0, 0, 1, 1], [], []>} : vector<66x128xbf16>, vector<128x256xbf16>, vector<66x256xf32> -> vector<66x256xf32>
    %c0_11 = arith.constant 0 : index
    %c128 = arith.constant 128 : index
    %17 = vector.load %arg3[%c0_11, %c128] : memref<1x1344xf32, #tpu.memory_space<vmem>>, vector<1x256xf32>
    %18 = vector.broadcast %17 : vector<1x256xf32> to vector<66x256xf32>
    %19 = arith.addf %16, %18 : vector<66x256xf32>
    %cst_12 = arith.constant 0.000000e+00 : f32
    %20 = vector.broadcast %cst_12 : f32 to vector<66x256xf32>
    %21 = arith.maximumf %19, %20 : vector<66x256xf32>
    %22 = arith.truncf %21 : vector<66x256xf32> to vector<66x256xbf16>
    %c0_13 = arith.constant 0 : index
    %c0_14 = arith.constant 0 : index
    %23 = vector.load %arg2[%c0_13, %c0_14] : memref<768x512xbf16, #tpu.memory_space<vmem>>, vector<256x512xbf16>
    %cst_15 = arith.constant dense<0.000000e+00> : vector<66x256xf32>
    %24 = tpu.matmul %0, %22, %cst_15 {dimension_numbers = #tpu.dot_dimension_numbers<[1], [0], [0], [1], [0, 0, 1, 1], [], []>} : vector<66x66xbf16>, vector<66x256xbf16>, vector<66x256xf32> -> vector<66x256xf32>
    %25 = arith.truncf %24 : vector<66x256xf32> to vector<66x256xbf16>
    %cst_16 = arith.constant dense<0.000000e+00> : vector<66x512xf32>
    %26 = tpu.matmul %25, %23, %cst_16 {dimension_numbers = #tpu.dot_dimension_numbers<[1], [0], [0], [1], [0, 0, 1, 1], [], []>} : vector<66x256xbf16>, vector<256x512xbf16>, vector<66x512xf32> -> vector<66x512xf32>
    %c0_17 = arith.constant 0 : index
    %c384_18 = arith.constant 384 : index
    %27 = vector.load %arg3[%c0_17, %c384_18] : memref<1x1344xf32, #tpu.memory_space<vmem>>, vector<1x512xf32>
    %28 = vector.broadcast %27 : vector<1x512xf32> to vector<66x512xf32>
    %29 = arith.addf %26, %28 : vector<66x512xf32>
    %cst_19 = arith.constant 0.000000e+00 : f32
    %30 = vector.broadcast %cst_19 : f32 to vector<66x512xf32>
    %31 = arith.maximumf %29, %30 : vector<66x512xf32>
    %cst_20 = arith.constant dense<0.000000e+00> : vector<66xf32>
    %32 = vector.multi_reduction <add>, %31, %cst_20 [1] : vector<66x512xf32> to vector<66xf32>
    %33 = vector.shape_cast %32 : vector<66xf32> to vector<66x1xf32>
    %34 = vector.extract_strided_slice %33 {offsets = [0, 0], sizes = [33, 1], strides = [1, 1]} : vector<66x1xf32> to vector<33x1xf32>
    %35 = vector.extract_strided_slice %33 {offsets = [33, 0], sizes = [33, 1], strides = [1, 1]} : vector<66x1xf32> to vector<33x1xf32>
    %36 = arith.addf %34, %35 : vector<33x1xf32>
    %37 = tpu.concatenate %36, %36 in 0 : vector<33x1xf32>, vector<33x1xf32> -> vector<66x1xf32>
    %cst_21 = arith.constant 9.765625E-4 : f32
    %38 = vector.broadcast %cst_21 : f32 to vector<66x1xf32>
    %39 = arith.mulf %37, %38 : vector<66x1xf32>
    %40 = vector.broadcast %39 : vector<66x1xf32> to vector<66x512xf32>
    %41 = arith.subf %31, %40 : vector<66x512xf32>
    %42 = arith.mulf %41, %41 : vector<66x512xf32>
    %cst_22 = arith.constant dense<0.000000e+00> : vector<66xf32>
    %43 = vector.multi_reduction <add>, %42, %cst_22 [1] : vector<66x512xf32> to vector<66xf32>
    %44 = vector.shape_cast %43 : vector<66xf32> to vector<66x1xf32>
    %45 = vector.extract_strided_slice %44 {offsets = [0, 0], sizes = [33, 1], strides = [1, 1]} : vector<66x1xf32> to vector<33x1xf32>
    %46 = vector.extract_strided_slice %44 {offsets = [33, 0], sizes = [33, 1], strides = [1, 1]} : vector<66x1xf32> to vector<33x1xf32>
    %47 = arith.addf %45, %46 : vector<33x1xf32>
    %48 = tpu.concatenate %47, %47 in 0 : vector<33x1xf32>, vector<33x1xf32> -> vector<66x1xf32>
    %cst_23 = arith.constant 9.765625E-4 : f32
    %49 = vector.broadcast %cst_23 : f32 to vector<66x1xf32>
    %50 = arith.mulf %48, %49 : vector<66x1xf32>
    %cst_24 = arith.constant 9.99999974E-6 : f32
    %51 = vector.broadcast %cst_24 : f32 to vector<66x1xf32>
    %52 = arith.addf %50, %51 : vector<66x1xf32>
    %53 = math.rsqrt %52 : vector<66x1xf32>
    %54 = vector.broadcast %53 : vector<66x1xf32> to vector<66x512xf32>
    %55 = arith.mulf %41, %54 : vector<66x512xf32>
    %c0_25 = arith.constant 0 : index
    %c0_26 = arith.constant 0 : index
    %56 = vector.load %arg4[%c0_25, %c0_26] : memref<66x1xf32, #tpu.memory_space<vmem>>, vector<66x1xf32>
    %57 = vector.broadcast %56 : vector<66x1xf32> to vector<66x512xf32>
    %58 = arith.mulf %55, %57 : vector<66x512xf32>
    %c0_27 = arith.constant 0 : index
    %c0_28 = arith.constant 0 : index
    %59 = vector.load %arg5[%c0_27, %c0_28] : memref<66x1xf32, #tpu.memory_space<vmem>>, vector<66x1xf32>
    %60 = vector.broadcast %59 : vector<66x1xf32> to vector<66x512xf32>
    %61 = arith.addf %58, %60 : vector<66x512xf32>
    %62 = arith.truncf %61 : vector<66x512xf32> to vector<66x512xbf16>
    %c256_29 = arith.constant 256 : index
    %c0_30 = arith.constant 0 : index
    %63 = vector.load %arg2[%c256_29, %c0_30] : memref<768x512xbf16, #tpu.memory_space<vmem>>, vector<512x256xbf16>
    %cst_31 = arith.constant dense<0.000000e+00> : vector<66x256xf32>
    %64 = tpu.matmul %62, %63, %cst_31 {dimension_numbers = #tpu.dot_dimension_numbers<[1], [0], [0], [1], [0, 0, 1, 1], [], []>} : vector<66x512xbf16>, vector<512x256xbf16>, vector<66x256xf32> -> vector<66x256xf32>
    %65 = arith.truncf %64 : vector<66x256xf32> to vector<66x256xbf16>
    %cst_32 = arith.constant dense<0.000000e+00> : vector<66x256xf32>
    %66 = tpu.matmul %0, %65, %cst_32 {dimension_numbers = #tpu.dot_dimension_numbers<[1], [0], [0], [1], [0, 0, 1, 1], [], []>} : vector<66x66xbf16>, vector<66x256xbf16>, vector<66x256xf32> -> vector<66x256xf32>
    %c0_33 = arith.constant 0 : index
    %c896 = arith.constant 896 : index
    %67 = vector.load %arg3[%c0_33, %c896] : memref<1x1344xf32, #tpu.memory_space<vmem>>, vector<1x256xf32>
    %68 = vector.broadcast %67 : vector<1x256xf32> to vector<66x256xf32>
    %69 = arith.addf %66, %68 : vector<66x256xf32>
    %cst_34 = arith.constant 0.000000e+00 : f32
    %70 = vector.broadcast %cst_34 : f32 to vector<66x256xf32>
    %71 = arith.maximumf %69, %70 : vector<66x256xf32>
    %72 = arith.truncf %71 : vector<66x256xf32> to vector<66x256xbf16>
    %c384_35 = arith.constant 384 : index
    %c256_36 = arith.constant 256 : index
    %73 = vector.load %arg2[%c384_35, %c256_36] : memref<768x512xbf16, #tpu.memory_space<vmem>>, vector<256x128xbf16>
    %cst_37 = arith.constant dense<0.000000e+00> : vector<66x128xf32>
    %74 = tpu.matmul %72, %73, %cst_37 {dimension_numbers = #tpu.dot_dimension_numbers<[1], [0], [0], [1], [0, 0, 1, 1], [], []>} : vector<66x256xbf16>, vector<256x128xbf16>, vector<66x128xf32> -> vector<66x128xf32>
    %75 = arith.truncf %74 : vector<66x128xf32> to vector<66x128xbf16>
    %cst_38 = arith.constant dense<0.000000e+00> : vector<66x128xf32>
    %76 = tpu.matmul %0, %75, %cst_38 {dimension_numbers = #tpu.dot_dimension_numbers<[1], [0], [0], [1], [0, 0, 1, 1], [], []>} : vector<66x66xbf16>, vector<66x128xbf16>, vector<66x128xf32> -> vector<66x128xf32>
    %c0_39 = arith.constant 0 : index
    %c1152 = arith.constant 1152 : index
    %77 = vector.load %arg3[%c0_39, %c1152] : memref<1x1344xf32, #tpu.memory_space<vmem>>, vector<1x128xf32>
    %78 = vector.broadcast %77 : vector<1x128xf32> to vector<66x128xf32>
    %79 = arith.addf %76, %78 : vector<66x128xf32>
    %cst_40 = arith.constant 0.000000e+00 : f32
    %80 = vector.broadcast %cst_40 : f32 to vector<66x128xf32>
    %81 = arith.maximumf %79, %80 : vector<66x128xf32>
    %82 = arith.truncf %81 : vector<66x128xf32> to vector<66x128xbf16>
    %c448 = arith.constant 448 : index
    %c384_41 = arith.constant 384 : index
    %83 = vector.load %arg2[%c448, %c384_41] : memref<768x512xbf16, #tpu.memory_space<vmem>>, vector<128x64xbf16>
    %cst_42 = arith.constant dense<0.000000e+00> : vector<66x64xf32>
    %84 = tpu.matmul %82, %83, %cst_42 {dimension_numbers = #tpu.dot_dimension_numbers<[1], [0], [0], [1], [0, 0, 1, 1], [], []>} : vector<66x128xbf16>, vector<128x64xbf16>, vector<66x64xf32> -> vector<66x64xf32>
    %85 = arith.truncf %84 : vector<66x64xf32> to vector<66x64xbf16>
    %cst_43 = arith.constant dense<0.000000e+00> : vector<66x64xf32>
    %86 = tpu.matmul %0, %85, %cst_43 {dimension_numbers = #tpu.dot_dimension_numbers<[1], [0], [0], [1], [0, 0, 1, 1], [], []>} : vector<66x66xbf16>, vector<66x64xbf16>, vector<66x64xf32> -> vector<66x64xf32>
    %c0_44 = arith.constant 0 : index
    %c1280 = arith.constant 1280 : index
    %87 = vector.load %arg3[%c0_44, %c1280] : memref<1x1344xf32, #tpu.memory_space<vmem>>, vector<1x64xf32>
    %88 = vector.broadcast %87 : vector<1x64xf32> to vector<66x64xf32>
    %89 = arith.addf %86, %88 : vector<66x64xf32>
    %90 = arith.negf %89 : vector<66x64xf32>
    %91 = math.exp %90 : vector<66x64xf32>
    %cst_45 = arith.constant 1.000000e+00 : f32
    %92 = vector.broadcast %cst_45 : f32 to vector<66x64xf32>
    %93 = arith.addf %92, %91 : vector<66x64xf32>
    %94 = arith.divf %92, %93 : vector<66x64xf32>
    %c0_46 = arith.constant 0 : index
    %c0_47 = arith.constant 0 : index
    %95 = vector.load %arg6[%c0_46, %c0_47] : memref<66x64xf32, #tpu.memory_space<vmem>>, vector<66x64xf32>
    tpu.vector_store %arg6[%c0_46, %c0_47], %94 {strides = array<i32>} : memref<66x64xf32, #tpu.memory_space<vmem>>, vector<66x64xf32>,
    return
  }
}

</mosaic_0001>

<llo_original>
// kernel: tpu_custom_call.1
$region0: #{tpu_custom_call.1}
  #allocation0 [shape = 'u32[]', space=smem, size = 0x4, offset = 0x4, fixed_abs, tag = 'smem constant byte address 0x4 - core index']
  #allocation1 [shape = 'u32[72,128]{1,0:T(1,128)}', space=vmem, size = 0x9000, scoped, tag = 'internal scratch']
  %s0 = inlined_call_operand.vmem [shape: f32[66,64], index: 0, kind: input, shape index: {}]
  %s1 = inlined_call_operand.vmem [shape: bf16[66,66], index: 1, kind: input, shape index: {}]
  %s2 = inlined_call_operand.hbm [shape: bf16[768,512], index: 2, kind: input, shape index: {}]
  %s3 = inlined_call_operand.vmem [shape: f32[1,1344], index: 3, kind: input, shape index: {}]
  %s4 = inlined_call_operand.vmem [shape: f32[66,1], index: 4, kind: input, shape index: {}]
  %s5 = inlined_call_operand.vmem [shape: f32[66,1], index: 5, kind: input, shape index: {}]
  %s6 = inlined_call_operand.vmem [shape: f32[66,64], index: 6, kind: output, shape index: {}]
  %s7 = sld [smem:[#allocation0]]
  $region38: #{tpu_custom_call.1} parent=0
    _
  %s9 = ssub.s32 1, %s7
  %s10 = scalar_select 0, %s9, %s7
  $region1: #{tpu_custom_call.1} parent=0
    #allocation2 [shape = 'u8[786432]{0}', space=vmem, size = 0xc0000, scoped, tag = 'input window, operand 2, single buffered']
    #allocation3 [shape = 's32[1]{0}', space=sflag, size = 0x4, scoped, tag = 'scoped memory for tpu_custom_call.1']
    %11 = vsyncpa [#allocation3], 0
    // Predicated region
    $region2: #{tpu_custom_call.1} parent=1 // pred_check
      _
    $region3: #{tpu_custom_call.1} parent=1 // pred_check_branch
      %13 = sbr.rel (0) target = $region5
    $region4: #{tpu_custom_call.1} parent=1 // pred_region
      _
    $region5: #{tpu_custom_call.1} parent=1 // pred_fallthru
      _
    // Predicated region
    $region6: #{tpu_custom_call.1} parent=1 // pred_check
      _
    $region7: #{tpu_custom_call.1} parent=1 // pred_check_branch
      %15 = sbr.rel (0) target = $region9
    $region8: #{tpu_custom_call.1} parent=1 // pred_region
      _
    $region9: #{tpu_custom_call.1} parent=1 // pred_fallthru
      _
    // Predicated region
    $region10: #{tpu_custom_call.1} parent=1 // pred_check
      _
    $region11: #{tpu_custom_call.1} parent=1 // pred_check_branch
      %17 = sbr.rel (0) target = $region13
    $region12: #{tpu_custom_call.1} parent=1 // pred_region
      %19 = vsyncadd [#allocation3], 0
      %s20 = sshll.u32 %s2, 4
      %s21 = int_to_ptr.hbm [resolvable:$true] %s20
      %s22 = sshll.u32 [#allocation2], 4
      %s23 = int_to_ptr.vmem [resolvable:$true] %s22
      %28 = dma.hbm_to_vmem [thread:$0]  %s21, 24576, %s23, [#allocation3], 256, 256, 16
    $region13: #{tpu_custom_call.1} parent=1 // pred_fallthru
      _
    // Predicated region
    $region14: #{tpu_custom_call.1} parent=1 // pred_check
      _
    $region15: #{tpu_custom_call.1} parent=1 // pred_check_branch
      %30 = sbr.rel (0) target = $region17
    $region16: #{tpu_custom_call.1} parent=1 // pred_region
      _
    $region17: #{tpu_custom_call.1} parent=1 // pred_fallthru
      _
    // Predicated region
    $region18: #{tpu_custom_call.1} parent=1 // pred_check
      _
    $region19: #{tpu_custom_call.1} parent=1 // pred_check_branch
      %32 = sbr.rel (0) target = $region21
    $region20: #{tpu_custom_call.1} parent=1 // pred_region
      _
    $region21: #{tpu_custom_call.1} parent=1 // pred_fallthru
      _
    // Predicated region
    $region22: #{tpu_custom_call.1} parent=1 // pred_check
      _
    $region23: #{tpu_custom_call.1} parent=1 // pred_check_branch
      %34 = sbr.rel (0) target = $region25
    $region24: #{tpu_custom_call.1} parent=1 // pred_region
      _
    $region25: #{tpu_custom_call.1} parent=1 // pred_fallthru
      _
    // Predicated region
    $region26: #{tpu_custom_call.1} parent=1 // pred_check
      _
    $region27: #{tpu_custom_call.1} parent=1 // pred_check_branch
      %36 = sbr.rel (0) target = $region29
    $region28: #{tpu_custom_call.1} parent=1 // pred_region
      %38 = dma.done [#allocation3], 24576
    $region29: #{tpu_custom_call.1} parent=1 // pred_fallthru
      _
    %v40 = vld [vmem:[%s1] sm:$0xf]
    %v41 = vld [vmem:[%s1 + $0x4] sm:$0xf]
    %v42 = vld [vmem:[%s1 + $0x8] sm:$0xf]
    %v43 = vld [vmem:[%s1 + $0xc] sm:$0xf]
    %v44 = vld [vmem:[%s1 + $0x10] sm:$0xf]
    %v45 = vld [vmem:[%s1 + $0x14] sm:$0xf]
    %v46 = vld [vmem:[%s1 + $0x18] sm:$0xf]
    %v47 = vld [vmem:[%s1 + $0x1c] sm:$0xf]
    %v48 = vld [vmem:[%s1 + $0x20] sm:$0x1]
    %v49 = vld [vmem:[%s0] sm:$0xff]
    %v50 = vld [vmem:[%s0 + $0x8] sm:$0xff]
    %v51 = vld [vmem:[%s0 + $0x10] sm:$0xff]
    %v52 = vld [vmem:[%s0 + $0x18] sm:$0xff]
    %v53 = vld [vmem:[%s0 + $0x20] sm:$0xff]
    %v54 = vld [vmem:[%s0 + $0x28] sm:$0xff]
    %v55 = vld [vmem:[%s0 + $0x30] sm:$0xff]
    %v56 = vld [vmem:[%s0 + $0x38] sm:$0xff]
    %v57 = vld [vmem:[%s0 + $0x40] sm:$0x3]
    %v58 = vpack.c.bf16 %v50, %v49
    %v59 = vpack.c.bf16 %v52, %v51
    %v60 = vpack.c.bf16 %v54, %v53
    %v61 = vpack.c.bf16 %v56, %v55
    %v62 = vpack.c.bf16 %v57, %v57
    %v63 = vld [vmem:[#allocation2 + $0x30c] sm:$0xf]
    %v64 = vld [vmem:[#allocation2 + $0x31c] sm:$0xf]
    %v65 = vld [vmem:[#allocation2 + $0x32c] sm:$0xf]
    %v66 = vld [vmem:[#allocation2 + $0x33c] sm:$0xf]
    %v67 = vld [vmem:[#allocation2 + $0x34c] sm:$0xf]
    %v68 = vld [vmem:[#allocation2 + $0x35c] sm:$0xf]
    %v69 = vld [vmem:[#allocation2 + $0x36c] sm:$0xf]
    %v70 = vld [vmem:[#allocation2 + $0x37c] sm:$0xf]
    %v80 = vunpack.c.l.b16 %v40
    %v81 = vunpack.c.l.b16 %v41
    %v82 = vunpack.c.l.b16 %v42
    %v83 = vunpack.c.l.b16 %v43
    %v84 = vunpack.c.l.b16 %v44
    %v85 = vunpack.c.l.b16 %v45
    %v86 = vunpack.c.l.b16 %v46
    %v87 = vunpack.c.l.b16 %v47
    %v88 = vunpack.c.l.b16 %v48
    %v89 = vpack.c.b16 %v81, %v80
    %v90 = vpack.c.b16 %v83, %v82
    %v91 = vpack.c.b16 %v85, %v84
    %v92 = vpack.c.b16 %v87, %v86
    %v93 = vpack.c.b16 %v88, %v88
    %vm94 = vcmask 539648
    %v96 = vsel %vm94, %v89, 0
    %v99 = vsel %vm94, %v90, 0
    %v102 = vsel %vm94, %v91, 0
    %v105 = vsel %vm94, %v92, 0
    %v108 = vsel %vm94, %v93, 0
    %vm110 = vcmask 1040384
    %v112 = vsel %vm110, %v62, 0
    %114 = vmatpush.bf16.msra.mxu0 0
    %115 = vmatpush.bf16.msra.mxu0 0
    %116 = vmatpush.bf16.msra.mxu0 0
    %117 = vmatpush.bf16.msra.mxu0 %v112
    %118 = vmatpush.bf16.msra.mxu0 %v61
    %119 = vmatpush.bf16.msra.mxu0 %v60
    %120 = vmatpush.bf16.msra.mxu0 %v59
    %121 = vmatpush.bf16.msra.mxu0 %v58
    %122 = vmatmul.bf16.gmra.mxu0 %v96
    %v123 = vpop.f32.mrf.mxu0
    %v124 = vadd.f32 0.0, %v123
    %v125 = vpop.f32.mrf.mxu0
    %v126 = vadd.f32 0.0, %v125
    %127 = vmatmul.bf16.gmra.mxu0 %v99
    %v128 = vpop.f32.mrf.mxu0
    %v129 = vadd.f32 0.0, %v128
    %v130 = vpop.f32.mrf.mxu0
    %v131 = vadd.f32 0.0, %v130
    %132 = vmatmul.bf16.gmra.mxu0 %v102
    %v133 = vpop.f32.mrf.mxu0
    %v134 = vadd.f32 0.0, %v133
    %v135 = vpop.f32.mrf.mxu0
    %v136 = vadd.f32 0.0, %v135
    %137 = vmatmul.bf16.gmra.mxu0 %v105
    %v138 = vpop.f32.mrf.mxu0
    %v139 = vadd.f32 0.0, %v138
    %v140 = vpop.f32.mrf.mxu0
    %v141 = vadd.f32 0.0, %v140
    %142 = vmatmul.bf16.gmra.mxu0 %v108
    %v143 = vpop.f32.mrf.mxu0
    %v144 = vadd.f32 0.0, %v143
    %v145 = vpop.f32.mrf.mxu0
    %146 = vdwg.mxu0
    %v147 = vpack.c.bf16 %v126, %v124
    %v148 = vpack.c.bf16 %v131, %v129
    %v149 = vpack.c.bf16 %v136, %v134
    %v150 = vpack.c.bf16 %v141, %v139
    %v151 = vpack.c.bf16 %v144, %v144
    %v152 = vld [vmem:[%s3] sm:$0x1]
    %v154 = vperm.slane %v152, 0
    %v164 = vunpack.c.l.b16 %v63
    %v165 = vunpack.c.l.b16 %v64
    %v166 = vunpack.c.l.b16 %v65
    %v167 = vunpack.c.l.b16 %v66
    %v168 = vunpack.c.l.b16 %v67
    %v169 = vunpack.c.l.b16 %v68
    %v170 = vunpack.c.l.b16 %v69
    %v171 = vunpack.c.l.b16 %v70
    %v172 = vpack.c.b16 %v165, %v164
    %v173 = vpack.c.b16 %v167, %v166
    %v174 = vpack.c.b16 %v169, %v168
    %v175 = vpack.c.b16 %v171, %v170
    %vm180 = vcmask 523264
    %v182 = vsel %vm180, %v147, 0
    %v185 = vsel %vm180, %v148, 0
    %v188 = vsel %vm180, %v149, 0
    %v191 = vsel %vm180, %v150, 0
    %v194 = vsel %vm180, %v151, 0
    %196 = vmatpush.bf16.msra.mxu0 0
    %197 = vmatpush.bf16.msra.mxu0 0
    %198 = vmatpush.bf16.msra.mxu0 0
    %199 = vmatpush.bf16.msra.mxu0 0
    %200 = vmatpush.bf16.msra.mxu0 %v175
    %201 = vmatpush.bf16.msra.mxu0 %v174
    %202 = vmatpush.bf16.msra.mxu0 %v173
    %203 = vmatpush.bf16.msra.mxu0 %v172
    %204 = vmatmul.bf16.gmra.mxu0 %v182
    %v205 = vpop.f32.mrf.mxu0
    %v206 = vadd.f32 %v154, %v205
    %v207 = vpop.f32.mrf.mxu0
    %v208 = vadd.f32 %v154, %v207
    %209 = vmatmul.bf16.gmra.mxu0 %v185
    %v210 = vpop.f32.mrf.mxu0
    %v211 = vadd.f32 %v154, %v210
    %v212 = vpop.f32.mrf.mxu0
    %v213 = vadd.f32 %v154, %v212
    %214 = vmatmul.bf16.gmra.mxu0 %v188
    %v215 = vpop.f32.mrf.mxu0
    %v216 = vadd.f32 %v154, %v215
    %v217 = vpop.f32.mrf.mxu0
    %v218 = vadd.f32 %v154, %v217
    %219 = vmatmul.bf16.gmra.mxu0 %v191
    %v220 = vpop.f32.mrf.mxu0
    %v221 = vadd.f32 %v154, %v220
    %v222 = vpop.f32.mrf.mxu0
    %v223 = vadd.f32 %v154, %v222
    %224 = vmatmul.bf16.gmra.mxu0 %v194
    %v225 = vpop.f32.mrf.mxu0
    %v226 = vadd.f32 %v154, %v225
    %v227 = vpop.f32.mrf.mxu0
    %228 = vdwg.mxu0
    %v229 = vmax.f32 %v206, 0.0
    %v230 = vmax.f32 %v208, 0.0
    %v231 = vmax.f32 %v211, 0.0
    %v232 = vmax.f32 %v213, 0.0
    %v233 = vmax.f32 %v216, 0.0
    %v234 = vmax.f32 %v218, 0.0
    %v235 = vmax.f32 %v221, 0.0
    %v236 = vmax.f32 %v223, 0.0
    %v237 = vmax.f32 %v226, 0.0
    %v238 = vpack.c.bf16 %v230, %v229
    %v239 = vpack.c.bf16 %v232, %v231
    %v240 = vpack.c.bf16 %v234, %v233
    %v241 = vpack.c.bf16 %v236, %v235
    %v242 = vpack.c.bf16 %v237, %v237
    %v243 = vld [vmem:[#allocation2 + $0x208] sm:$0xff]
    %v244 = vld [vmem:[#allocation2 + $0x218] sm:$0xff]
    %v245 = vld [vmem:[#allocation2 + $0x228] sm:$0xff]
    %v246 = vld [vmem:[#allocation2 + $0x238] sm:$0xff]
    %v247 = vld [vmem:[#allocation2 + $0x248] sm:$0xff]
    %v248 = vld [vmem:[#allocation2 + $0x258] sm:$0xff]
    %v249 = vld [vmem:[#allocation2 + $0x268] sm:$0xff]
    %v250 = vld [vmem:[#allocation2 + $0x278] sm:$0xff]
    %v251 = vld [vmem:[#allocation2 + $0x288] sm:$0xff]
    %v252 = vld [vmem:[#allocation2 + $0x298] sm:$0xff]
    %v253 = vld [vmem:[#allocation2 + $0x2a8] sm:$0xff]
    %v254 = vld [vmem:[#allocation2 + $0x2b8] sm:$0xff]
    %v255 = vld [vmem:[#allocation2 + $0x2c8] sm:$0xff]
    %v256 = vld [vmem:[#allocation2 + $0x2d8] sm:$0xff]
    %v257 = vld [vmem:[#allocation2 + $0x2e8] sm:$0xff]
    %v258 = vld [vmem:[#allocation2 + $0x2f8] sm:$0xff]
    %v260 = vsel %vm110, %v242, 0
    %262 = vmatpush.bf16.msra.mxu0 0
    %263 = vmatpush.bf16.msra.mxu0 0
    %264 = vmatpush.bf16.msra.mxu0 0
    %265 = vmatpush.bf16.msra.mxu0 %v260
    %266 = vmatpush.bf16.msra.mxu0 %v241
    %267 = vmatpush.bf16.msra.mxu0 %v240
    %268 = vmatpush.bf16.msra.mxu0 %v239
    %269 = vmatpush.bf16.msra.mxu0 %v238
    %270 = vmatmul.bf16.gmra.mxu0 %v96
    %v271 = vpop.f32.mrf.mxu0
    %v272 = vadd.f32 0.0, %v271
    %v273 = vpop.f32.mrf.mxu0
    %v274 = vadd.f32 0.0, %v273
    %275 = vmatmul.bf16.gmra.mxu0 %v99
    %v276 = vpop.f32.mrf.mxu0
    %v277 = vadd.f32 0.0, %v276
    %v278 = vpop.f32.mrf.mxu0
    %v279 = vadd.f32 0.0, %v278
    %280 = vmatmul.bf16.gmra.mxu0 %v102
    %v281 = vpop.f32.mrf.mxu0
    %v282 = vadd.f32 0.0, %v281
    %v283 = vpop.f32.mrf.mxu0
    %v284 = vadd.f32 0.0, %v283
    %285 = vmatmul.bf16.gmra.mxu0 %v105
    %v286 = vpop.f32.mrf.mxu0
    %v287 = vadd.f32 0.0, %v286
    %v288 = vpop.f32.mrf.mxu0
    %v289 = vadd.f32 0.0, %v288
    %290 = vmatmul.bf16.gmra.mxu0 %v108
    %v291 = vpop.f32.mrf.mxu0
    %v292 = vadd.f32 0.0, %v291
    %v293 = vpop.f32.mrf.mxu0
    %294 = vdwg.mxu0
    %v295 = vpack.c.bf16 %v274, %v272
    %v296 = vpack.c.bf16 %v279, %v277
    %v297 = vpack.c.bf16 %v284, %v282
    %v298 = vpack.c.bf16 %v289, %v287
    %v299 = vpack.c.bf16 %v292, %v292
    %v300 = vld [vmem:[%s3 + $0x1] sm:$0x3]
    %v302 = vperm.slane %v300, 0
    %v303 = vperm.slane %v300, 1
    %v322 = vunpack.c.l.b16 %v243
    %v323 = vunpack.c.h.b16 %v243
    %v324 = vunpack.c.l.b16 %v244
    %v325 = vunpack.c.h.b16 %v244
    %v326 = vunpack.c.l.b16 %v245
    %v327 = vunpack.c.h.b16 %v245
    %v328 = vunpack.c.l.b16 %v246
    %v329 = vunpack.c.h.b16 %v246
    %v330 = vunpack.c.l.b16 %v247
    %v331 = vunpack.c.h.b16 %v247
    %v332 = vunpack.c.l.b16 %v248
    %v333 = vunpack.c.h.b16 %v248
    %v334 = vunpack.c.l.b16 %v249
    %v335 = vunpack.c.h.b16 %v249
    %v336 = vunpack.c.l.b16 %v250
    %v337 = vunpack.c.h.b16 %v250
    %v338 = vunpack.c.l.b16 %v251
    %v339 = vunpack.c.h.b16 %v251
    %v340 = vunpack.c.l.b16 %v252
    %v341 = vunpack.c.h.b16 %v252
    %v342 = vunpack.c.l.b16 %v253
    %v343 = vunpack.c.h.b16 %v253
    %v344 = vunpack.c.l.b16 %v254
    %v345 = vunpack.c.h.b16 %v254
    %v346 = vunpack.c.l.b16 %v255
    %v347 = vunpack.c.h.b16 %v255
    %v348 = vunpack.c.l.b16 %v256
    %v349 = vunpack.c.h.b16 %v256
    %v350 = vunpack.c.l.b16 %v257
    %v351 = vunpack.c.h.b16 %v257
    %v352 = vunpack.c.l.b16 %v258
    %v353 = vunpack.c.h.b16 %v258
    %v354 = vpack.c.b16 %v324, %v322
    %v355 = vpack.c.b16 %v325, %v323
    %v356 = vpack.c.b16 %v328, %v326
    %v357 = vpack.c.b16 %v329, %v327
    %v358 = vpack.c.b16 %v332, %v330
    %v359 = vpack.c.b16 %v333, %v331
    %v360 = vpack.c.b16 %v336, %v334
    %v361 = vpack.c.b16 %v337, %v335
    %v362 = vpack.c.b16 %v340, %v338
    %v363 = vpack.c.b16 %v341, %v339
    %v364 = vpack.c.b16 %v344, %v342
    %v365 = vpack.c.b16 %v345, %v343
    %v366 = vpack.c.b16 %v348, %v346
    %v367 = vpack.c.b16 %v349, %v347
    %v368 = vpack.c.b16 %v352, %v350
    %v369 = vpack.c.b16 %v353, %v351
    %386 = vmatpush.bf16.msra.mxu0 %v368
    %387 = vmatpush.bf16.msra.mxu0 %v366
    %388 = vmatpush.bf16.msra.mxu0 %v364
    %389 = vmatpush.bf16.msra.mxu0 %v362
    %390 = vmatpush.bf16.msra.mxu0 %v360
    %391 = vmatpush.bf16.msra.mxu0 %v358
    %392 = vmatpush.bf16.msra.mxu0 %v356
    %393 = vmatpush.bf16.msra.mxu0 %v354
    %394 = vmatmul.bf16.gmra.mxu0 %v295
    %v395 = vpop.f32.mrf.mxu0
    %v396 = vadd.f32 %v302, %v395
    %v397 = vpop.f32.mrf.mxu0
    %v398 = vadd.f32 %v302, %v397
    %399 = vmatmul.bf16.gmra.mxu0 %v296
    %v400 = vpop.f32.mrf.mxu0
    %v401 = vadd.f32 %v302, %v400
    %v402 = vpop.f32.mrf.mxu0
    %v403 = vadd.f32 %v302, %v402
    %404 = vmatmul.bf16.gmra.mxu0 %v297
    %v405 = vpop.f32.mrf.mxu0
    %v406 = vadd.f32 %v302, %v405
    %v407 = vpop.f32.mrf.mxu0
    %v408 = vadd.f32 %v302, %v407
    %409 = vmatmul.bf16.gmra.mxu0 %v298
    %v410 = vpop.f32.mrf.mxu0
    %v411 = vadd.f32 %v302, %v410
    %v412 = vpop.f32.mrf.mxu0
    %v413 = vadd.f32 %v302, %v412
    %414 = vmatmul.bf16.gmra.mxu0 %v299
    %v415 = vpop.f32.mrf.mxu0
    %v416 = vadd.f32 %v302, %v415
    %v417 = vpop.f32.mrf.mxu0
    %418 = vdwg.mxu0
    %419 = vmatpush.bf16.msra.mxu0 %v369
    %420 = vmatpush.bf16.msra.mxu0 %v367
    %421 = vmatpush.bf16.msra.mxu0 %v365
    %422 = vmatpush.bf16.msra.mxu0 %v363
    %423 = vmatpush.bf16.msra.mxu0 %v361
    %424 = vmatpush.bf16.msra.mxu0 %v359
    %425 = vmatpush.bf16.msra.mxu0 %v357
    %426 = vmatpush.bf16.msra.mxu0 %v355
    %427 = vmatmul.bf16.gmra.mxu0 %v295
    %v428 = vpop.f32.mrf.mxu0
    %v429 = vadd.f32 %v303, %v428
    %v430 = vpop.f32.mrf.mxu0
    %v431 = vadd.f32 %v303, %v430
    %432 = vmatmul.bf16.gmra.mxu0 %v296
    %v433 = vpop.f32.mrf.mxu0
    %v434 = vadd.f32 %v303, %v433
    %v435 = vpop.f32.mrf.mxu0
    %v436 = vadd.f32 %v303, %v435
    %437 = vmatmul.bf16.gmra.mxu0 %v297
    %v438 = vpop.f32.mrf.mxu0
    %v439 = vadd.f32 %v303, %v438
    %v440 = vpop.f32.mrf.mxu0
    %v441 = vadd.f32 %v303, %v440
    %442 = vmatmul.bf16.gmra.mxu0 %v298
    %v443 = vpop.f32.mrf.mxu0
    %v444 = vadd.f32 %v303, %v443
    %v445 = vpop.f32.mrf.mxu0
    %v446 = vadd.f32 %v303, %v445
    %447 = vmatmul.bf16.gmra.mxu0 %v299
    %v448 = vpop.f32.mrf.mxu0
    %v449 = vadd.f32 %v303, %v448
    %v450 = vpop.f32.mrf.mxu0
    %451 = vdwg.mxu0
    %v452 = vmax.f32 %v396, 0.0
    %v453 = vmax.f32 %v429, 0.0
    %v454 = vmax.f32 %v398, 0.0
    %v455 = vmax.f32 %v431, 0.0
    %v456 = vmax.f32 %v401, 0.0
    %v457 = vmax.f32 %v434, 0.0
    %v458 = vmax.f32 %v403, 0.0
    %v459 = vmax.f32 %v436, 0.0
    %v460 = vmax.f32 %v406, 0.0
    %v461 = vmax.f32 %v439, 0.0
    %v462 = vmax.f32 %v408, 0.0
    %v463 = vmax.f32 %v441, 0.0
    %v464 = vmax.f32 %v411, 0.0
    %v465 = vmax.f32 %v444, 0.0
    %v466 = vmax.f32 %v413, 0.0
    %v467 = vmax.f32 %v446, 0.0
    %v468 = vmax.f32 %v416, 0.0
    %v469 = vmax.f32 %v449, 0.0
    %v470 = vpack.c.bf16 %v454, %v452
    %v471 = vpack.c.bf16 %v455, %v453
    %v472 = vpack.c.bf16 %v458, %v456
    %v473 = vpack.c.bf16 %v459, %v457
    %v474 = vpack.c.bf16 %v462, %v460
    %v475 = vpack.c.bf16 %v463, %v461
    %v476 = vpack.c.bf16 %v466, %v464
    %v477 = vpack.c.bf16 %v467, %v465
    %v478 = vpack.c.bf16 %v468, %v468
    %v479 = vpack.c.bf16 %v469, %v469
    %v480 = vld [vmem:[#allocation2] sm:$0xff]
    %v481 = vld [vmem:[#allocation2 + $0x8] sm:$0xff]
    %v482 = vld [vmem:[#allocation2 + $0x10] sm:$0xff]
    %v483 = vld [vmem:[#allocation2 + $0x18] sm:$0xff]
    %v484 = vld [vmem:[#allocation2 + $0x20] sm:$0xff]
    %v485 = vld [vmem:[#allocation2 + $0x28] sm:$0xff]
    %v486 = vld [vmem:[#allocation2 + $0x30] sm:$0xff]
    %v487 = vld [vmem:[#allocation2 + $0x38] sm:$0xff]
    %v488 = vld [vmem:[#allocation2 + $0x40] sm:$0xff]
    %v489 = vld [vmem:[#allocation2 + $0x48] sm:$0xff]
    %v490 = vld [vmem:[#allocation2 + $0x50] sm:$0xff]
    %v491 = vld [vmem:[#allocation2 + $0x58] sm:$0xff]
    %v492 = vld [vmem:[#allocation2 + $0x60] sm:$0xff]
    %v493 = vld [vmem:[#allocation2 + $0x68] sm:$0xff]
    %v494 = vld [vmem:[#allocation2 + $0x70] sm:$0xff]
    %v495 = vld [vmem:[#allocation2 + $0x78] sm:$0xff]
    %v496 = vld [vmem:[#allocation2 + $0x80] sm:$0xff]
    %v497 = vld [vmem:[#allocation2 + $0x88] sm:$0xff]
    %v498 = vld [vmem:[#allocation2 + $0x90] sm:$0xff]
    %v499 = vld [vmem:[#allocation2 + $0x98] sm:$0xff]
    %v500 = vld [vmem:[#allocation2 + $0xa0] sm:$0xff]
    %v501 = vld [vmem:[#allocation2 + $0xa8] sm:$0xff]
    %v502 = vld [vmem:[#allocation2 + $0xb0] sm:$0xff]
    %v503 = vld [vmem:[#allocation2 + $0xb8] sm:$0xff]
    %v504 = vld [vmem:[#allocation2 + $0xc0] sm:$0xff]
    %v505 = vld [vmem:[#allocation2 + $0xc8] sm:$0xff]
    %v506 = vld [vmem:[#allocation2 + $0xd0] sm:$0xff]
    %v507 = vld [vmem:[#allocation2 + $0xd8] sm:$0xff]
    %v508 = vld [vmem:[#allocation2 + $0xe0] sm:$0xff]
    %v509 = vld [vmem:[#allocation2 + $0xe8] sm:$0xff]
    %v510 = vld [vmem:[#allocation2 + $0xf0] sm:$0xff]
    %v511 = vld [vmem:[#allocation2 + $0xf8] sm:$0xff]
    %v512 = vld [vmem:[#allocation2 + $0x100] sm:$0xff]
    %v513 = vld [vmem:[#allocation2 + $0x108] sm:$0xff]
    %v514 = vld [vmem:[#allocation2 + $0x110] sm:$0xff]
    %v515 = vld [vmem:[#allocation2 + $0x118] sm:$0xff]
    %v516 = vld [vmem:[#allocation2 + $0x120] sm:$0xff]
    %v517 = vld [vmem:[#allocation2 + $0x128] sm:$0xff]
    %v518 = vld [vmem:[#allocation2 + $0x130] sm:$0xff]
    %v519 = vld [vmem:[#allocation2 + $0x138] sm:$0xff]
    %v520 = vld [vmem:[#allocation2 + $0x140] sm:$0xff]
    %v521 = vld [vmem:[#allocation2 + $0x148] sm:$0xff]
    %v522 = vld [vmem:[#allocation2 + $0x150] sm:$0xff]
    %v523 = vld [vmem:[#allocation2 + $0x158] sm:$0xff]
    %v524 = vld [vmem:[#allocation2 + $0x160] sm:$0xff]
    %v525 = vld [vmem:[#allocation2 + $0x168] sm:$0xff]
    %v526 = vld [vmem:[#allocation2 + $0x170] sm:$0xff]
    %v527 = vld [vmem:[#allocation2 + $0x178] sm:$0xff]
    %v528 = vld [vmem:[#allocation2 + $0x180] sm:$0xff]
    %v529 = vld [vmem:[#allocation2 + $0x188] sm:$0xff]
    %v530 = vld [vmem:[#allocation2 + $0x190] sm:$0xff]
    %v531 = vld [vmem:[#allocation2 + $0x198] sm:$0xff]
    %v532 = vld [vmem:[#allocation2 + $0x1a0] sm:$0xff]
    %v533 = vld [vmem:[#allocation2 + $0x1a8] sm:$0xff]
    %v534 = vld [vmem:[#allocation2 + $0x1b0] sm:$0xff]
    %v535 = vld [vmem:[#allocation2 + $0x1b8] sm:$0xff]
    %v536 = vld [vmem:[#allocation2 + $0x1c0] sm:$0xff]
    %v537 = vld [vmem:[#allocation2 + $0x1c8] sm:$0xff]
    %v538 = vld [vmem:[#allocation2 + $0x1d0] sm:$0xff]
    %v539 = vld [vmem:[#allocation2 + $0x1d8] sm:$0xff]
    %v540 = vld [vmem:[#allocation2 + $0x1e0] sm:$0xff]
    %v541 = vld [vmem:[#allocation2 + $0x1e8] sm:$0xff]
    %v542 = vld [vmem:[#allocation2 + $0x1f0] sm:$0xff]
    %v543 = vld [vmem:[#allocation2 + $0x1f8] sm:$0xff]
    %v545 = vsel %vm110, %v478, 0
    %v548 = vsel %vm110, %v479, 0
    %550 = vmatpush.bf16.msra.mxu0 0
    %551 = vmatpush.bf16.msra.mxu0 0
    %552 = vmatpush.bf16.msra.mxu0 0
    %553 = vmatpush.bf16.msra.mxu0 %v545
    %554 = vmatpush.bf16.msra.mxu0 %v476
    %555 = vmatpush.bf16.msra.mxu0 %v474
    %556 = vmatpush.bf16.msra.mxu0 %v472
    %557 = vmatpush.bf16.msra.mxu0 %v470
    %558 = vmatmul.bf16.gmra.mxu0 %v96
    %v559 = vpop.f32.mrf.mxu0
    %v560 = vadd.f32 0.0, %v559
    %v561 = vpop.f32.mrf.mxu0
    %v562 = vadd.f32 0.0, %v561
    %563 = vmatmul.bf16.gmra.mxu0 %v99
    %v564 = vpop.f32.mrf.mxu0
    %v565 = vadd.f32 0.0, %v564
    %v566 = vpop.f32.mrf.mxu0
    %v567 = vadd.f32 0.0, %v566
    %568 = vmatmul.bf16.gmra.mxu0 %v102
    %v569 = vpop.f32.mrf.mxu0
    %v570 = vadd.f32 0.0, %v569
    %v571 = vpop.f32.mrf.mxu0
    %v572 = vadd.f32 0.0, %v571
    %573 = vmatmul.bf16.gmra.mxu0 %v105
    %v574 = vpop.f32.mrf.mxu0
    %v575 = vadd.f32 0.0, %v574
    %v576 = vpop.f32.mrf.mxu0
    %v577 = vadd.f32 0.0, %v576
    %578 = vmatmul.bf16.gmra.mxu0 %v108
    %v579 = vpop.f32.mrf.mxu0
    %v580 = vadd.f32 0.0, %v579
    %v581 = vpop.f32.mrf.mxu0
    %582 = vdwg.mxu0
    %583 = vmatpush.bf16.msra.mxu0 0
    %584 = vmatpush.bf16.msra.mxu0 0
    %585 = vmatpush.bf16.msra.mxu0 0
    %586 = vmatpush.bf16.msra.mxu0 %v548
    %587 = vmatpush.bf16.msra.mxu0 %v477
    %588 = vmatpush.bf16.msra.mxu0 %v475
    %589 = vmatpush.bf16.msra.mxu0 %v473
    %590 = vmatpush.bf16.msra.mxu0 %v471
    %591 = vmatmul.bf16.gmra.mxu0 %v96
    %v592 = vpop.f32.mrf.mxu0
    %v593 = vadd.f32 0.0, %v592
    %v594 = vpop.f32.mrf.mxu0
    %v595 = vadd.f32 0.0, %v594
    %596 = vmatmul.bf16.gmra.mxu0 %v99
    %v597 = vpop.f32.mrf.mxu0
    %v598 = vadd.f32 0.0, %v597
    %v599 = vpop.f32.mrf.mxu0
    %v600 = vadd.f32 0.0, %v599
    %601 = vmatmul.bf16.gmra.mxu0 %v102
    %v602 = vpop.f32.mrf.mxu0
    %v603 = vadd.f32 0.0, %v602
    %v604 = vpop.f32.mrf.mxu0
    %v605 = vadd.f32 0.0, %v604
    %606 = vmatmul.bf16.gmra.mxu0 %v105
    %v607 = vpop.f32.mrf.mxu0
    %v608 = vadd.f32 0.0, %v607
    %v609 = vpop.f32.mrf.mxu0
    %v610 = vadd.f32 0.0, %v609
    %611 = vmatmul.bf16.gmra.mxu0 %v108
    %v612 = vpop.f32.mrf.mxu0
    %v613 = vadd.f32 0.0, %v612
    %v614 = vpop.f32.mrf.mxu0
    %615 = vdwg.mxu0
    %v616 = vpack.c.bf16 %v562, %v560
    %v617 = vpack.c.bf16 %v595, %v593
    %v618 = vpack.c.bf16 %v567, %v565
    %v619 = vpack.c.bf16 %v600, %v598
    %v620 = vpack.c.bf16 %v572, %v570
    %v621 = vpack.c.bf16 %v605, %v603
    %v622 = vpack.c.bf16 %v577, %v575
    %v623 = vpack.c.bf16 %v610, %v608
    %v624 = vpack.c.bf16 %v580, %v580
    %v625 = vpack.c.bf16 %v613, %v613
    %v626 = vld [vmem:[%s3 + $0x3] sm:$0xf]
    %v628 = vperm.slane %v626, 0
    %v629 = vperm.slane %v626, 1
    %v630 = vperm.slane %v626, 2
    %v631 = vperm.slane %v626, 3
    %v700 = vunpack.c.l.b16 %v480
    %v701 = vunpack.c.h.b16 %v480
    %v702 = vunpack.c.l.b16 %v481
    %v703 = vunpack.c.h.b16 %v481
    %v704 = vunpack.c.l.b16 %v482
    %v705 = vunpack.c.h.b16 %v482
    %v706 = vunpack.c.l.b16 %v483
    %v707 = vunpack.c.h.b16 %v483
    %v708 = vunpack.c.l.b16 %v484
    %v709 = vunpack.c.h.b16 %v484
    %v710 = vunpack.c.l.b16 %v485
    %v711 = vunpack.c.h.b16 %v485
    %v712 = vunpack.c.l.b16 %v486
    %v713 = vunpack.c.h.b16 %v486
    %v714 = vunpack.c.l.b16 %v487
    %v715 = vunpack.c.h.b16 %v487
    %v716 = vunpack.c.l.b16 %v488
    %v717 = vunpack.c.h.b16 %v488
    %v718 = vunpack.c.l.b16 %v489
    %v719 = vunpack.c.h.b16 %v489
    %v720 = vunpack.c.l.b16 %v490
    %v721 = vunpack.c.h.b16 %v490
    %v722 = vunpack.c.l.b16 %v491
    %v723 = vunpack.c.h.b16 %v491
    %v724 = vunpack.c.l.b16 %v492
    %v725 = vunpack.c.h.b16 %v492
    %v726 = vunpack.c.l.b16 %v493
    %v727 = vunpack.c.h.b16 %v493
    %v728 = vunpack.c.l.b16 %v494
    %v729 = vunpack.c.h.b16 %v494
    %v730 = vunpack.c.l.b16 %v495
    %v731 = vunpack.c.h.b16 %v495
    %v732 = vunpack.c.l.b16 %v496
    %v733 = vunpack.c.h.b16 %v496
    %v734 = vunpack.c.l.b16 %v497
    %v735 = vunpack.c.h.b16 %v497
    %v736 = vunpack.c.l.b16 %v498
    %v737 = vunpack.c.h.b16 %v498
    %v738 = vunpack.c.l.b16 %v499
    %v739 = vunpack.c.h.b16 %v499
    %v740 = vunpack.c.l.b16 %v500
    %v741 = vunpack.c.h.b16 %v500
    %v742 = vunpack.c.l.b16 %v501
    %v743 = vunpack.c.h.b16 %v501
    %v744 = vunpack.c.l.b16 %v502
    %v745 = vunpack.c.h.b16 %v502
    %v746 = vunpack.c.l.b16 %v503
    %v747 = vunpack.c.h.b16 %v503
    %v748 = vunpack.c.l.b16 %v504
    %v749 = vunpack.c.h.b16 %v504
    %v750 = vunpack.c.l.b16 %v505
    %v751 = vunpack.c.h.b16 %v505
    %v752 = vunpack.c.l.b16 %v506
    %v753 = vunpack.c.h.b16 %v506
    %v754 = vunpack.c.l.b16 %v507
    %v755 = vunpack.c.h.b16 %v507
    %v756 = vunpack.c.l.b16 %v508
    %v757 = vunpack.c.h.b16 %v508
    %v758 = vunpack.c.l.b16 %v509
    %v759 = vunpack.c.h.b16 %v509
    %v760 = vunpack.c.l.b16 %v510
    %v761 = vunpack.c.h.b16 %v510
    %v762 = vunpack.c.l.b16 %v511
    %v763 = vunpack.c.h.b16 %v511
    %v764 = vunpack.c.l.b16 %v512
    %v765 = vunpack.c.h.b16 %v512
    %v766 = vunpack.c.l.b16 %v513
    %v767 = vunpack.c.h.b16 %v513
    %v768 = vunpack.c.l.b16 %v514
    %v769 = vunpack.c.h.b16 %v514
    %v770 = vunpack.c.l.b16 %v515
    %v771 = vunpack.c.h.b16 %v515
    %v772 = vunpack.c.l.b16 %v516
    %v773 = vunpack.c.h.b16 %v516
    %v774 = vunpack.c.l.b16 %v517
    %v775 = vunpack.c.h.b16 %v517
    %v776 = vunpack.c.l.b16 %v518
    %v777 = vunpack.c.h.b16 %v518
    %v778 = vunpack.c.l.b16 %v519
    %v779 = vunpack.c.h.b16 %v519
    %v780 = vunpack.c.l.b16 %v520
    %v781 = vunpack.c.h.b16 %v520
    %v782 = vunpack.c.l.b16 %v521
    %v783 = vunpack.c.h.b16 %v521
    %v784 = vunpack.c.l.b16 %v522
    %v785 = vunpack.c.h.b16 %v522
    %v786 = vunpack.c.l.b16 %v523
    %v787 = vunpack.c.h.b16 %v523
    %v788 = vunpack.c.l.b16 %v524
    %v789 = vunpack.c.h.b16 %v524
    %v790 = vunpack.c.l.b16 %v525
    %v791 = vunpack.c.h.b16 %v525
    %v792 = vunpack.c.l.b16 %v526
    %v793 = vunpack.c.h.b16 %v526
    %v794 = vunpack.c.l.b16 %v527
    %v795 = vunpack.c.h.b16 %v527
    %v796 = vunpack.c.l.b16 %v528
    %v797 = vunpack.c.h.b16 %v528
    %v798 = vunpack.c.l.b16 %v529
    %v799 = vunpack.c.h.b16 %v529
    %v800 = vunpack.c.l.b16 %v530
    %v801 = vunpack.c.h.b16 %v530
    %v802 = vunpack.c.l.b16 %v531
    %v803 = vunpack.c.h.b16 %v531
    %v804 = vunpack.c.l.b16 %v532
    %v805 = vunpack.c.h.b16 %v532
    %v806 = vunpack.c.l.b16 %v533
    %v807 = vunpack.c.h.b16 %v533
    %v808 = vunpack.c.l.b16 %v534
    %v809 = vunpack.c.h.b16 %v534
    %v810 = vunpack.c.l.b16 %v535
    %v811 = vunpack.c.h.b16 %v535
    %v812 = vunpack.c.l.b16 %v536
    %v813 = vunpack.c.h.b16 %v536
    %v814 = vunpack.c.l.b16 %v537
    %v815 = vunpack.c.h.b16 %v537
    %v816 = vunpack.c.l.b16 %v538
    %v817 = vunpack.c.h.b16 %v538
    %v818 = vunpack.c.l.b16 %v539
    %v819 = vunpack.c.h.b16 %v539
    %v820 = vunpack.c.l.b16 %v540
    %v821 = vunpack.c.h.b16 %v540
    %v822 = vunpack.c.l.b16 %v541
    %v823 = vunpack.c.h.b16 %v541
    %v824 = vunpack.c.l.b16 %v542
    %v825 = vunpack.c.h.b16 %v542
    %v826 = vunpack.c.l.b16 %v543
    %v827 = vunpack.c.h.b16 %v543
    %v828 = vpack.c.b16 %v704, %v700
    %v829 = vpack.c.b16 %v705, %v701
    %v830 = vpack.c.b16 %v706, %v702
    %v831 = vpack.c.b16 %v707, %v703
    %v832 = vpack.c.b16 %v712, %v708
    %v833 = vpack.c.b16 %v713, %v709
    %v834 = vpack.c.b16 %v714, %v710
    %v835 = vpack.c.b16 %v715, %v711
    %v836 = vpack.c.b16 %v720, %v716
    %v837 = vpack.c.b16 %v721, %v717
    %v838 = vpack.c.b16 %v722, %v718
    %v839 = vpack.c.b16 %v723, %v719
    %v840 = vpack.c.b16 %v728, %v724
    %v841 = vpack.c.b16 %v729, %v725
    %v842 = vpack.c.b16 %v730, %v726
    %v843 = vpack.c.b16 %v731, %v727
    %v844 = vpack.c.b16 %v736, %v732
    %v845 = vpack.c.b16 %v737, %v733
    %v846 = vpack.c.b16 %v738, %v734
    %v847 = vpack.c.b16 %v739, %v735
    %v848 = vpack.c.b16 %v744, %v740
    %v849 = vpack.c.b16 %v745, %v741
    %v850 = vpack.c.b16 %v746, %v742
    %v851 = vpack.c.b16 %v747, %v743
    %v852 = vpack.c.b16 %v752, %v748
    %v853 = vpack.c.b16 %v753, %v749
    %v854 = vpack.c.b16 %v754, %v750
    %v855 = vpack.c.b16 %v755, %v751
    %v856 = vpack.c.b16 %v760, %v756
    %v857 = vpack.c.b16 %v761, %v757
    %v858 = vpack.c.b16 %v762, %v758
    %v859 = vpack.c.b16 %v763, %v759
    %v860 = vpack.c.b16 %v768, %v764
    %v861 = vpack.c.b16 %v769, %v765
    %v862 = vpack.c.b16 %v770, %v766
    %v863 = vpack.c.b16 %v771, %v767
    %v864 = vpack.c.b16 %v776, %v772
    %v865 = vpack.c.b16 %v777, %v773
    %v866 = vpack.c.b16 %v778, %v774
    %v867 = vpack.c.b16 %v779, %v775
    %v868 = vpack.c.b16 %v784, %v780
    %v869 = vpack.c.b16 %v785, %v781
    %v870 = vpack.c.b16 %v786, %v782
    %v871 = vpack.c.b16 %v787, %v783
    %v872 = vpack.c.b16 %v792, %v788
    %v873 = vpack.c.b16 %v793, %v789
    %v874 = vpack.c.b16 %v794, %v790
    %v875 = vpack.c.b16 %v795, %v791
    %v876 = vpack.c.b16 %v800, %v796
    %v877 = vpack.c.b16 %v801, %v797
    %v878 = vpack.c.b16 %v802, %v798
    %v879 = vpack.c.b16 %v803, %v799
    %v880 = vpack.c.b16 %v808, %v804
    %v881 = vpack.c.b16 %v809, %v805
    %v882 = vpack.c.b16 %v810, %v806
    %v883 = vpack.c.b16 %v811, %v807
    %v884 = vpack.c.b16 %v816, %v812
    %v885 = vpack.c.b16 %v817, %v813
    %v886 = vpack.c.b16 %v818, %v814
    %v887 = vpack.c.b16 %v819, %v815
    %v888 = vpack.c.b16 %v824, %v820
    %v889 = vpack.c.b16 %v825, %v821
    %v890 = vpack.c.b16 %v826, %v822
    %v891 = vpack.c.b16 %v827, %v823
    %956 = vmatpush.bf16.msra.mxu0 %v856
    %957 = vmatpush.bf16.msra.mxu0 %v852
    %958 = vmatpush.bf16.msra.mxu0 %v848
    %959 = vmatpush.bf16.msra.mxu0 %v844
    %960 = vmatpush.bf16.msra.mxu0 %v840
    %961 = vmatpush.bf16.msra.mxu0 %v836
    %962 = vmatpush.bf16.msra.mxu0 %v832
    %963 = vmatpush.bf16.msra.mxu0 %v828
    %964 = vmatmul.bf16.gmra.mxu0 %v616
    %v965 = vpop.f32.mrf.mxu0
    %v966 = vadd.f32 %v628, %v965
    %v967 = vpop.f32.mrf.mxu0
    %v968 = vadd.f32 %v628, %v967
    %969 = vmatmul.bf16.gmra.mxu0 %v618
    %v970 = vpop.f32.mrf.mxu0
    %v971 = vadd.f32 %v628, %v970
    %v972 = vpop.f32.mrf.mxu0
    %v973 = vadd.f32 %v628, %v972
    %974 = vmatmul.bf16.gmra.mxu0 %v620
    %v975 = vpop.f32.mrf.mxu0
    %v976 = vadd.f32 %v628, %v975
    %v977 = vpop.f32.mrf.mxu0
    %v978 = vadd.f32 %v628, %v977
    %979 = vmatmul.bf16.gmra.mxu0 %v622
    %v980 = vpop.f32.mrf.mxu0
    %v981 = vadd.f32 %v628, %v980
    %v982 = vpop.f32.mrf.mxu0
    %v983 = vadd.f32 %v628, %v982
    %984 = vmatmul.bf16.gmra.mxu0 %v624
    %v985 = vpop.f32.mrf.mxu0
    %v986 = vadd.f32 %v628, %v985
    %v987 = vpop.f32.mrf.mxu0
    %988 = vdwg.mxu0
    %989 = vmatpush.bf16.msra.mxu0 %v888
    %990 = vmatpush.bf16.msra.mxu0 %v884
    %991 = vmatpush.bf16.msra.mxu0 %v880
    %992 = vmatpush.bf16.msra.mxu0 %v876
    %993 = vmatpush.bf16.msra.mxu0 %v872
    %994 = vmatpush.bf16.msra.mxu0 %v868
    %995 = vmatpush.bf16.msra.mxu0 %v864
    %996 = vmatpush.bf16.msra.mxu0 %v860
    %997 = vmatmul.bf16.gmra.mxu0 %v617
    %v998 = vpop.f32.mrf.mxu0
    %v999 = vadd.f32 %v966, %v998
    %v1000 = vpop.f32.mrf.mxu0
    %v1001 = vadd.f32 %v968, %v1000
    %1002 = vmatmul.bf16.gmra.mxu0 %v619
    %v1003 = vpop.f32.mrf.mxu0
    %v1004 = vadd.f32 %v971, %v1003
    %v1005 = vpop.f32.mrf.mxu0
    %v1006 = vadd.f32 %v973, %v1005
    %1007 = vmatmul.bf16.gmra.mxu0 %v621
    %v1008 = vpop.f32.mrf.mxu0
    %v1009 = vadd.f32 %v976, %v1008
    %v1010 = vpop.f32.mrf.mxu0
    %v1011 = vadd.f32 %v978, %v1010
    %1012 = vmatmul.bf16.gmra.mxu0 %v623
    %v1013 = vpop.f32.mrf.mxu0
    %v1014 = vadd.f32 %v981, %v1013
    %v1015 = vpop.f32.mrf.mxu0
    %v1016 = vadd.f32 %v983, %v1015
    %1017 = vmatmul.bf16.gmra.mxu0 %v625
    %v1018 = vpop.f32.mrf.mxu0
    %v1019 = vadd.f32 %v986, %v1018
    %v1020 = vpop.f32.mrf.mxu0
    %1021 = vdwg.mxu0
    %1022 = vmatpush.bf16.msra.mxu0 %v857
    %1023 = vmatpush.bf16.msra.mxu0 %v853
    %1024 = vmatpush.bf16.msra.mxu0 %v849
    %1025 = vmatpush.bf16.msra.mxu0 %v845
    %1026 = vmatpush.bf16.msra.mxu0 %v841
    %1027 = vmatpush.bf16.msra.mxu0 %v837
    %1028 = vmatpush.bf16.msra.mxu0 %v833
    %1029 = vmatpush.bf16.msra.mxu0 %v829
    %1030 = vmatmul.bf16.gmra.mxu0 %v616
    %v1031 = vpop.f32.mrf.mxu0
    %v1032 = vadd.f32 %v629, %v1031
    %v1033 = vpop.f32.mrf.mxu0
    %v1034 = vadd.f32 %v629, %v1033
    %1035 = vmatmul.bf16.gmra.mxu0 %v618
    %v1036 = vpop.f32.mrf.mxu0
    %v1037 = vadd.f32 %v629, %v1036
    %v1038 = vpop.f32.mrf.mxu0
    %v1039 = vadd.f32 %v629, %v1038
    %1040 = vmatmul.bf16.gmra.mxu0 %v620
    %v1041 = vpop.f32.mrf.mxu0
    %v1042 = vadd.f32 %v629, %v1041
    %v1043 = vpop.f32.mrf.mxu0
    %v1044 = vadd.f32 %v629, %v1043
    %1045 = vmatmul.bf16.gmra.mxu0 %v622
    %v1046 = vpop.f32.mrf.mxu0
    %v1047 = vadd.f32 %v629, %v1046
    %v1048 = vpop.f32.mrf.mxu0
    %v1049 = vadd.f32 %v629, %v1048
    %1050 = vmatmul.bf16.gmra.mxu0 %v624
    %v1051 = vpop.f32.mrf.mxu0
    %v1052 = vadd.f32 %v629, %v1051
    %v1053 = vpop.f32.mrf.mxu0
    %1054 = vdwg.mxu0
    %1055 = vmatpush.bf16.msra.mxu0 %v889
    %1056 = vmatpush.bf16.msra.mxu0 %v885
    %1057 = vmatpush.bf16.msra.mxu0 %v881
    %1058 = vmatpush.bf16.msra.mxu0 %v877
    %1059 = vmatpush.bf16.msra.mxu0 %v873
    %1060 = vmatpush.bf16.msra.mxu0 %v869
    %1061 = vmatpush.bf16.msra.mxu0 %v865
    %1062 = vmatpush.bf16.msra.mxu0 %v861
    %1063 = vmatmul.bf16.gmra.mxu0 %v617
    %v1064 = vpop.f32.mrf.mxu0
    %v1065 = vadd.f32 %v1032, %v1064
    %v1066 = vpop.f32.mrf.mxu0
    %v1067 = vadd.f32 %v1034, %v1066
    %1068 = vmatmul.bf16.gmra.mxu0 %v619
    %v1069 = vpop.f32.mrf.mxu0
    %v1070 = vadd.f32 %v1037, %v1069
    %v1071 = vpop.f32.mrf.mxu0
    %v1072 = vadd.f32 %v1039, %v1071
    %1073 = vmatmul.bf16.gmra.mxu0 %v621
    %v1074 = vpop.f32.mrf.mxu0
    %v1075 = vadd.f32 %v1042, %v1074
    %v1076 = vpop.f32.mrf.mxu0
    %v1077 = vadd.f32 %v1044, %v1076
    %1078 = vmatmul.bf16.gmra.mxu0 %v623
    %v1079 = vpop.f32.mrf.mxu0
    %v1080 = vadd.f32 %v1047, %v1079
    %v1081 = vpop.f32.mrf.mxu0
    %v1082 = vadd.f32 %v1049, %v1081
    %1083 = vmatmul.bf16.gmra.mxu0 %v625
    %v1084 = vpop.f32.mrf.mxu0
    %v1085 = vadd.f32 %v1052, %v1084
    %v1086 = vpop.f32.mrf.mxu0
    %1087 = vdwg.mxu0
    %1088 = vmatpush.bf16.msra.mxu0 %v858
    %1089 = vmatpush.bf16.msra.mxu0 %v854
    %1090 = vmatpush.bf16.msra.mxu0 %v850
    %1091 = vmatpush.bf16.msra.mxu0 %v846
    %1092 = vmatpush.bf16.msra.mxu0 %v842
    %1093 = vmatpush.bf16.msra.mxu0 %v838
    %1094 = vmatpush.bf16.msra.mxu0 %v834
    %1095 = vmatpush.bf16.msra.mxu0 %v830
    %1096 = vmatmul.bf16.gmra.mxu0 %v616
    %v1097 = vpop.f32.mrf.mxu0
    %v1098 = vadd.f32 %v630, %v1097
    %v1099 = vpop.f32.mrf.mxu0
    %v1100 = vadd.f32 %v630, %v1099
    %1101 = vmatmul.bf16.gmra.mxu0 %v618
    %v1102 = vpop.f32.mrf.mxu0
    %v1103 = vadd.f32 %v630, %v1102
    %v1104 = vpop.f32.mrf.mxu0
    %v1105 = vadd.f32 %v630, %v1104
    %1106 = vmatmul.bf16.gmra.mxu0 %v620
    %v1107 = vpop.f32.mrf.mxu0
    %v1108 = vadd.f32 %v630, %v1107
    %v1109 = vpop.f32.mrf.mxu0
    %v1110 = vadd.f32 %v630, %v1109
    %1111 = vmatmul.bf16.gmra.mxu0 %v622
    %v1112 = vpop.f32.mrf.mxu0
    %v1113 = vadd.f32 %v630, %v1112
    %v1114 = vpop.f32.mrf.mxu0
    %v1115 = vadd.f32 %v630, %v1114
    %1116 = vmatmul.bf16.gmra.mxu0 %v624
    %v1117 = vpop.f32.mrf.mxu0
    %v1118 = vadd.f32 %v630, %v1117
    %v1119 = vpop.f32.mrf.mxu0
    %1120 = vdwg.mxu0
    %1121 = vmatpush.bf16.msra.mxu0 %v890
    %1122 = vmatpush.bf16.msra.mxu0 %v886
    %1123 = vmatpush.bf16.msra.mxu0 %v882
    %1124 = vmatpush.bf16.msra.mxu0 %v878
    %1125 = vmatpush.bf16.msra.mxu0 %v874
    %1126 = vmatpush.bf16.msra.mxu0 %v870
    %1127 = vmatpush.bf16.msra.mxu0 %v866
    %1128 = vmatpush.bf16.msra.mxu0 %v862
    %1129 = vmatmul.bf16.gmra.mxu0 %v617
    %v1130 = vpop.f32.mrf.mxu0
    %v1131 = vadd.f32 %v1098, %v1130
    %v1132 = vpop.f32.mrf.mxu0
    %v1133 = vadd.f32 %v1100, %v1132
    %1134 = vmatmul.bf16.gmra.mxu0 %v619
    %v1135 = vpop.f32.mrf.mxu0
    %v1136 = vadd.f32 %v1103, %v1135
    %v1137 = vpop.f32.mrf.mxu0
    %v1138 = vadd.f32 %v1105, %v1137
    %1139 = vmatmul.bf16.gmra.mxu0 %v621
    %v1140 = vpop.f32.mrf.mxu0
    %v1141 = vadd.f32 %v1108, %v1140
    %v1142 = vpop.f32.mrf.mxu0
    %v1143 = vadd.f32 %v1110, %v1142
    %1144 = vmatmul.bf16.gmra.mxu0 %v623
    %v1145 = vpop.f32.mrf.mxu0
    %v1146 = vadd.f32 %v1113, %v1145
    %v1147 = vpop.f32.mrf.mxu0
    %v1148 = vadd.f32 %v1115, %v1147
    %1149 = vmatmul.bf16.gmra.mxu0 %v625
    %v1150 = vpop.f32.mrf.mxu0
    %v1151 = vadd.f32 %v1118, %v1150
    %v1152 = vpop.f32.mrf.mxu0
    %1153 = vdwg.mxu0
    %1154 = vmatpush.bf16.msra.mxu0 %v859
    %1155 = vmatpush.bf16.msra.mxu0 %v855
    %1156 = vmatpush.bf16.msra.mxu0 %v851
    %1157 = vmatpush.bf16.msra.mxu0 %v847
    %1158 = vmatpush.bf16.msra.mxu0 %v843
    %1159 = vmatpush.bf16.msra.mxu0 %v839
    %1160 = vmatpush.bf16.msra.mxu0 %v835
    %1161 = vmatpush.bf16.msra.mxu0 %v831
    %1162 = vmatmul.bf16.gmra.mxu0 %v616
    %v1163 = vpop.f32.mrf.mxu0
    %v1164 = vadd.f32 %v631, %v1163
    %v1165 = vpop.f32.mrf.mxu0
    %v1166 = vadd.f32 %v631, %v1165
    %1167 = vmatmul.bf16.gmra.mxu0 %v618
    %v1168 = vpop.f32.mrf.mxu0
    %v1169 = vadd.f32 %v631, %v1168
    %v1170 = vpop.f32.mrf.mxu0
    %v1171 = vadd.f32 %v631, %v1170
    %1172 = vmatmul.bf16.gmra.mxu0 %v620
    %v1173 = vpop.f32.mrf.mxu0
    %v1174 = vadd.f32 %v631, %v1173
    %v1175 = vpop.f32.mrf.mxu0
    %v1176 = vadd.f32 %v631, %v1175
    %1177 = vmatmul.bf16.gmra.mxu0 %v622
    %v1178 = vpop.f32.mrf.mxu0
    %v1179 = vadd.f32 %v631, %v1178
    %v1180 = vpop.f32.mrf.mxu0
    %v1181 = vadd.f32 %v631, %v1180
    %1182 = vmatmul.bf16.gmra.mxu0 %v624
    %v1183 = vpop.f32.mrf.mxu0
    %v1184 = vadd.f32 %v631, %v1183
    %v1185 = vpop.f32.mrf.mxu0
    %1186 = vdwg.mxu0
    %1187 = vmatpush.bf16.msra.mxu0 %v891
    %1188 = vmatpush.bf16.msra.mxu0 %v887
    %1189 = vmatpush.bf16.msra.mxu0 %v883
    %1190 = vmatpush.bf16.msra.mxu0 %v879
    %1191 = vmatpush.bf16.msra.mxu0 %v875
    %1192 = vmatpush.bf16.msra.mxu0 %v871
    %1193 = vmatpush.bf16.msra.mxu0 %v867
    %1194 = vmatpush.bf16.msra.mxu0 %v863
    %1195 = vmatmul.bf16.gmra.mxu0 %v617
    %v1196 = vpop.f32.mrf.mxu0
    %v1197 = vadd.f32 %v1164, %v1196
    %v1198 = vpop.f32.mrf.mxu0
    %v1199 = vadd.f32 %v1166, %v1198
    %1200 = vmatmul.bf16.gmra.mxu0 %v619
    %v1201 = vpop.f32.mrf.mxu0
    %v1202 = vadd.f32 %v1169, %v1201
    %v1203 = vpop.f32.mrf.mxu0
    %v1204 = vadd.f32 %v1171, %v1203
    %1205 = vmatmul.bf16.gmra.mxu0 %v621
    %v1206 = vpop.f32.mrf.mxu0
    %v1207 = vadd.f32 %v1174, %v1206
    %v1208 = vpop.f32.mrf.mxu0
    %v1209 = vadd.f32 %v1176, %v1208
    %1210 = vmatmul.bf16.gmra.mxu0 %v623
    %v1211 = vpop.f32.mrf.mxu0
    %v1212 = vadd.f32 %v1179, %v1211
    %v1213 = vpop.f32.mrf.mxu0
    %v1214 = vadd.f32 %v1181, %v1213
    %1215 = vmatmul.bf16.gmra.mxu0 %v625
    %v1216 = vpop.f32.mrf.mxu0
    %v1217 = vadd.f32 %v1184, %v1216
    %v1218 = vpop.f32.mrf.mxu0
    %1219 = vdwg.mxu0
    %v1220 = vmax.f32 %v999, 0.0
    %v1221 = vmax.f32 %v1065, 0.0
    %v1222 = vmax.f32 %v1131, 0.0
    %v1223 = vmax.f32 %v1197, 0.0
    %v1224 = vmax.f32 %v1001, 0.0
    %v1225 = vmax.f32 %v1067, 0.0
    %v1226 = vmax.f32 %v1133, 0.0
    %v1227 = vmax.f32 %v1199, 0.0
    %v1228 = vmax.f32 %v1004, 0.0
    %v1229 = vmax.f32 %v1070, 0.0
    %v1230 = vmax.f32 %v1136, 0.0
    %v1231 = vmax.f32 %v1202, 0.0
    %v1232 = vmax.f32 %v1006, 0.0
    %v1233 = vmax.f32 %v1072, 0.0
    %v1234 = vmax.f32 %v1138, 0.0
    %v1235 = vmax.f32 %v1204, 0.0
    %v1236 = vmax.f32 %v1009, 0.0
    %v1237 = vmax.f32 %v1075, 0.0
    %v1238 = vmax.f32 %v1141, 0.0
    %v1239 = vmax.f32 %v1207, 0.0
    %v1240 = vmax.f32 %v1011, 0.0
    %v1241 = vmax.f32 %v1077, 0.0
    %v1242 = vmax.f32 %v1143, 0.0
    %v1243 = vmax.f32 %v1209, 0.0
    %v1244 = vmax.f32 %v1014, 0.0
    %v1245 = vmax.f32 %v1080, 0.0
    %v1246 = vmax.f32 %v1146, 0.0
    %v1247 = vmax.f32 %v1212, 0.0
    %v1248 = vmax.f32 %v1016, 0.0
    %v1249 = vmax.f32 %v1082, 0.0
    %v1250 = vmax.f32 %v1148, 0.0
    %v1251 = vmax.f32 %v1214, 0.0
    %v1252 = vmax.f32 %v1019, 0.0
    %v1253 = vmax.f32 %v1085, 0.0
    %v1254 = vmax.f32 %v1151, 0.0
    %v1255 = vmax.f32 %v1217, 0.0
    %v1256 = vadd.f32 %v1220, %v1221
    %v1257 = vadd.f32 %v1256, %v1222
    %v1258 = vadd.f32 %v1257, %v1223
    %1259 = vadd.xlane.f32.xlu0 %v1258
    %v1260 = vpop.xlane.xlu0 %1259
    %v1261 = vadd.f32 %v1224, %v1225
    %v1262 = vadd.f32 %v1261, %v1226
    %v1263 = vadd.f32 %v1262, %v1227
    %1264 = vadd.xlane.f32.xlu0 %v1263
    %v1265 = vpop.xlane.xlu0 %1264
    %v1266 = vadd.f32 %v1228, %v1229
    %v1267 = vadd.f32 %v1266, %v1230
    %v1268 = vadd.f32 %v1267, %v1231
    %1269 = vadd.xlane.f32.xlu0 %v1268
    %v1270 = vpop.xlane.xlu0 %1269
    %v1271 = vadd.f32 %v1232, %v1233
    %v1272 = vadd.f32 %v1271, %v1234
    %v1273 = vadd.f32 %v1272, %v1235
    %1274 = vadd.xlane.f32.xlu0 %v1273
    %v1275 = vpop.xlane.xlu0 %1274
    %v1276 = vadd.f32 %v1236, %v1237
    %v1277 = vadd.f32 %v1276, %v1238
    %v1278 = vadd.f32 %v1277, %v1239
    %1279 = vadd.xlane.f32.xlu0 %v1278
    %v1280 = vpop.xlane.xlu0 %1279
    %v1281 = vadd.f32 %v1240, %v1241
    %v1282 = vadd.f32 %v1281, %v1242
    %v1283 = vadd.f32 %v1282, %v1243
    %1284 = vadd.xlane.f32.xlu0 %v1283
    %v1285 = vpop.xlane.xlu0 %1284
    %v1286 = vadd.f32 %v1244, %v1245
    %v1287 = vadd.f32 %v1286, %v1246
    %v1288 = vadd.f32 %v1287, %v1247
    %1289 = vadd.xlane.f32.xlu0 %v1288
    %v1290 = vpop.xlane.xlu0 %1289
    %v1291 = vadd.f32 %v1248, %v1249
    %v1292 = vadd.f32 %v1291, %v1250
    %v1293 = vadd.f32 %v1292, %v1251
    %1294 = vadd.xlane.f32.xlu0 %v1293
    %v1295 = vpop.xlane.xlu0 %1294
    %vm1296 = vcmask 1041408
    %v1297 = vsel %vm1296, %v1252, 0.0
    %v1298 = vsel %vm1296, %v1253, 0.0
    %v1299 = vadd.f32 %v1297, %v1298
    %v1300 = vsel %vm1296, %v1254, 0.0
    %v1301 = vadd.f32 %v1299, %v1300
    %v1302 = vsel %vm1296, %v1255, 0.0
    %v1303 = vadd.f32 %v1301, %v1302
    %1304 = vadd.xlane.f32.xlu0 %v1303
    %v1305 = vpop.xlane.xlu0 %1304
    %vm1311 = vcmask 1046528
    %v1312 = vrot.slane %v1280, 1
    %v1313 = vrot.slane %v1285, 1
    %v1314 = vsel %vm1311, %v1312, %v1313
    %v1315 = vrot.slane %v1290, 1
    %v1316 = vsel %vm1311, %v1313, %v1315
    %v1317 = vrot.slane %v1295, 1
    %v1318 = vsel %vm1311, %v1315, %v1317
    %v1319 = vrot.slane %v1305, 1
    %v1320 = vsel %vm1311, %v1317, %v1319
    %v1326 = vadd.f32 %v1260, %v1314
    %v1327 = vadd.f32 %v1265, %v1316
    %v1328 = vadd.f32 %v1270, %v1318
    %v1329 = vadd.f32 %v1275, %v1320
    %v1330 = vadd.f32 %v1280, %v1319
    %v1336 = vrot.slane %v1326, 7
    %v1337 = vrot.slane %v1327, 7
    %v1338 = vsel %vm110, %v1336, %v1337
    %v1339 = vrot.slane %v1328, 7
    %v1340 = vsel %vm110, %v1337, %v1339
    %v1341 = vrot.slane %v1329, 7
    %v1342 = vsel %vm110, %v1339, %v1341
    %v1343 = vrot.slane %v1330, 7
    %v1344 = vsel %vm110, %v1341, %v1343
    %v1350 = vsel %vm110, %v1330, %v1336
    %v1351 = vmul.f32 %v1326, 0.0009765625
    %v1352 = vmul.f32 %v1327, 0.0009765625
    %v1353 = vmul.f32 %v1328, 0.0009765625
    %v1354 = vmul.f32 %v1329, 0.0009765625
    %v1355 = vmul.f32 %v1350, 0.0009765625
    %v1356 = vmul.f32 %v1338, 0.0009765625
    %v1357 = vmul.f32 %v1340, 0.0009765625
    %v1358 = vmul.f32 %v1342, 0.0009765625
    %v1359 = vmul.f32 %v1344, 0.0009765625
    %1361 = vset.pattern.permute.xlu0 0
    %1362 = vperm.xlu0 %1361, %v1351
    %v1363 = vpop.permute.xlu0 %1362
    %1366 = vset.pattern.permute.xlu0 0
    %1367 = vperm.xlu0 %1366, %v1352
    %v1368 = vpop.permute.xlu0 %1367
    %1371 = vset.pattern.permute.xlu0 0
    %1372 = vperm.xlu0 %1371, %v1353
    %v1373 = vpop.permute.xlu0 %1372
    %1376 = vset.pattern.permute.xlu0 0
    %1377 = vperm.xlu0 %1376, %v1354
    %v1378 = vpop.permute.xlu0 %1377
    %1381 = vset.pattern.permute.xlu0 0
    %1382 = vperm.xlu0 %1381, %v1355
    %v1383 = vpop.permute.xlu0 %1382
    %1386 = vset.pattern.permute.xlu0 0
    %1387 = vperm.xlu0 %1386, %v1356
    %v1388 = vpop.permute.xlu0 %1387
    %1391 = vset.pattern.permute.xlu0 0
    %1392 = vperm.xlu0 %1391, %v1357
    %v1393 = vpop.permute.xlu0 %1392
    %1396 = vset.pattern.permute.xlu0 0
    %1397 = vperm.xlu0 %1396, %v1358
    %v1398 = vpop.permute.xlu0 %1397
    %1401 = vset.pattern.permute.xlu0 0
    %1402 = vperm.xlu0 %1401, %v1359
    %v1403 = vpop.permute.xlu0 %1402
    %v1405 = vsub.f32 %v1220, %v1363
    %v1406 = vsub.f32 %v1221, %v1363
    %v1407 = vsub.f32 %v1222, %v1363
    %v1408 = vsub.f32 %v1223, %v1363
    %v1409 = vsub.f32 %v1224, %v1368
    %v1410 = vsub.f32 %v1225, %v1368
    %v1411 = vsub.f32 %v1226, %v1368
    %v1412 = vsub.f32 %v1227, %v1368
    %v1413 = vsub.f32 %v1228, %v1373
    %v1414 = vsub.f32 %v1229, %v1373
    %v1415 = vsub.f32 %v1230, %v1373
    %v1416 = vsub.f32 %v1231, %v1373
    %v1417 = vsub.f32 %v1232, %v1378
    %v1418 = vsub.f32 %v1233, %v1378
    %v1419 = vsub.f32 %v1234, %v1378
    %v1420 = vsub.f32 %v1235, %v1378
    %v1421 = vsub.f32 %v1236, %v1383
    %v1422 = vsub.f32 %v1237, %v1383
    %v1423 = vsub.f32 %v1238, %v1383
    %v1424 = vsub.f32 %v1239, %v1383
    %v1425 = vsub.f32 %v1240, %v1388
    %v1426 = vsub.f32 %v1241, %v1388
    %v1427 = vsub.f32 %v1242, %v1388
    %v1428 = vsub.f32 %v1243, %v1388
    %v1429 = vsub.f32 %v1244, %v1393
    %v1430 = vsub.f32 %v1245, %v1393
    %v1431 = vsub.f32 %v1246, %v1393
    %v1432 = vsub.f32 %v1247, %v1393
    %v1433 = vsub.f32 %v1248, %v1398
    %v1434 = vsub.f32 %v1249, %v1398
    %v1435 = vsub.f32 %v1250, %v1398
    %v1436 = vsub.f32 %v1251, %v1398
    %v1437 = vsub.f32 %v1252, %v1403
    %v1438 = vsub.f32 %v1253, %v1403
    %v1439 = vsub.f32 %v1254, %v1403
    %v1440 = vsub.f32 %v1255, %v1403
    %v1441 = vmul.f32 %v1405, %v1405
    %v1442 = vmul.f32 %v1406, %v1406
    %v1443 = vmul.f32 %v1407, %v1407
    %v1444 = vmul.f32 %v1408, %v1408
    %v1445 = vmul.f32 %v1409, %v1409
    %v1446 = vmul.f32 %v1410, %v1410
    %v1447 = vmul.f32 %v1411, %v1411
    %v1448 = vmul.f32 %v1412, %v1412
    %v1449 = vmul.f32 %v1413, %v1413
    %v1450 = vmul.f32 %v1414, %v1414
    %v1451 = vmul.f32 %v1415, %v1415
    %v1452 = vmul.f32 %v1416, %v1416
    %v1453 = vmul.f32 %v1417, %v1417
    %v1454 = vmul.f32 %v1418, %v1418
    %v1455 = vmul.f32 %v1419, %v1419
    %v1456 = vmul.f32 %v1420, %v1420
    %v1457 = vmul.f32 %v1421, %v1421
    %v1458 = vmul.f32 %v1422, %v1422
    %v1459 = vmul.f32 %v1423, %v1423
    %v1460 = vmul.f32 %v1424, %v1424
    %v1461 = vmul.f32 %v1425, %v1425
    %v1462 = vmul.f32 %v1426, %v1426
    %v1463 = vmul.f32 %v1427, %v1427
    %v1464 = vmul.f32 %v1428, %v1428
    %v1465 = vmul.f32 %v1429, %v1429
    %v1466 = vmul.f32 %v1430, %v1430
    %v1467 = vmul.f32 %v1431, %v1431
    %v1468 = vmul.f32 %v1432, %v1432
    %v1469 = vmul.f32 %v1433, %v1433
    %v1470 = vmul.f32 %v1434, %v1434
    %v1471 = vmul.f32 %v1435, %v1435
    %v1472 = vmul.f32 %v1436, %v1436
    %v1473 = vmul.f32 %v1437, %v1437
    %v1474 = vmul.f32 %v1438, %v1438
    %v1475 = vmul.f32 %v1439, %v1439
    %v1476 = vmul.f32 %v1440, %v1440
    %v1477 = vadd.f32 %v1441, %v1442
    %v1478 = vadd.f32 %v1477, %v1443
    %v1479 = vadd.f32 %v1478, %v1444
    %1480 = vadd.xlane.f32.xlu0 %v1479
    %v1481 = vpop.xlane.xlu0 %1480
    %v1482 = vadd.f32 %v1445, %v1446
    %v1483 = vadd.f32 %v1482, %v1447
    %v1484 = vadd.f32 %v1483, %v1448
    %1485 = vadd.xlane.f32.xlu0 %v1484
    %v1486 = vpop.xlane.xlu0 %1485
    %v1487 = vadd.f32 %v1449, %v1450
    %v1488 = vadd.f32 %v1487, %v1451
    %v1489 = vadd.f32 %v1488, %v1452
    %1490 = vadd.xlane.f32.xlu0 %v1489
    %v1491 = vpop.xlane.xlu0 %1490
    %v1492 = vadd.f32 %v1453, %v1454
    %v1493 = vadd.f32 %v1492, %v1455
    %v1494 = vadd.f32 %v1493, %v1456
    %1495 = vadd.xlane.f32.xlu0 %v1494
    %v1496 = vpop.xlane.xlu0 %1495
    %v1497 = vadd.f32 %v1457, %v1458
    %v1498 = vadd.f32 %v1497, %v1459
    %v1499 = vadd.f32 %v1498, %v1460
    %1500 = vadd.xlane.f32.xlu0 %v1499
    %v1501 = vpop.xlane.xlu0 %1500
    %v1502 = vadd.f32 %v1461, %v1462
    %v1503 = vadd.f32 %v1502, %v1463
    %v1504 = vadd.f32 %v1503, %v1464
    %1505 = vadd.xlane.f32.xlu0 %v1504
    %v1506 = vpop.xlane.xlu0 %1505
    %v1507 = vadd.f32 %v1465, %v1466
    %v1508 = vadd.f32 %v1507, %v1467
    %v1509 = vadd.f32 %v1508, %v1468
    %1510 = vadd.xlane.f32.xlu0 %v1509
    %v1511 = vpop.xlane.xlu0 %1510
    %v1512 = vadd.f32 %v1469, %v1470
    %v1513 = vadd.f32 %v1512, %v1471
    %v1514 = vadd.f32 %v1513, %v1472
    %1515 = vadd.xlane.f32.xlu0 %v1514
    %v1516 = vpop.xlane.xlu0 %1515
    %v1517 = vsel %vm1296, %v1473, 0.0
    %v1518 = vsel %vm1296, %v1474, 0.0
    %v1519 = vadd.f32 %v1517, %v1518
    %v1520 = vsel %vm1296, %v1475, 0.0
    %v1521 = vadd.f32 %v1519, %v1520
    %v1522 = vsel %vm1296, %v1476, 0.0
    %v1523 = vadd.f32 %v1521, %v1522
    %1524 = vadd.xlane.f32.xlu0 %v1523
    %v1525 = vpop.xlane.xlu0 %1524
    %v1531 = vrot.slane %v1501, 1
    %v1532 = vrot.slane %v1506, 1
    %v1533 = vsel %vm1311, %v1531, %v1532
    %v1534 = vrot.slane %v1511, 1
    %v1535 = vsel %vm1311, %v1532, %v1534
    %v1536 = vrot.slane %v1516, 1
    %v1537 = vsel %vm1311, %v1534, %v1536
    %v1538 = vrot.slane %v1525, 1
    %v1539 = vsel %vm1311, %v1536, %v1538
    %v1545 = vadd.f32 %v1481, %v1533
    %v1546 = vadd.f32 %v1486, %v1535
    %v1547 = vadd.f32 %v1491, %v1537
    %v1548 = vadd.f32 %v1496, %v1539
    %v1549 = vadd.f32 %v1501, %v1538
    %v1555 = vrot.slane %v1545, 7
    %v1556 = vrot.slane %v1546, 7
    %v1557 = vsel %vm110, %v1555, %v1556
    %v1558 = vrot.slane %v1547, 7
    %v1559 = vsel %vm110, %v1556, %v1558
    %v1560 = vrot.slane %v1548, 7
    %v1561 = vsel %vm110, %v1558, %v1560
    %v1562 = vrot.slane %v1549, 7
    %v1563 = vsel %vm110, %v1560, %v1562
    %v1569 = vsel %vm110, %v1549, %v1555
    %v1570 = vmul.f32 %v1545, 0.0009765625
    %v1571 = vmul.f32 %v1546, 0.0009765625
    %v1572 = vmul.f32 %v1547, 0.0009765625
    %v1573 = vmul.f32 %v1548, 0.0009765625
    %v1574 = vmul.f32 %v1569, 0.0009765625
    %v1575 = vmul.f32 %v1557, 0.0009765625
    %v1576 = vmul.f32 %v1559, 0.0009765625
    %v1577 = vmul.f32 %v1561, 0.0009765625
    %v1578 = vmul.f32 %v1563, 0.0009765625
    %v1579 = vadd.f32 %v1570, 1e-05
    %v1580 = vadd.f32 %v1571, 1e-05
    %v1581 = vadd.f32 %v1572, 1e-05
    %v1582 = vadd.f32 %v1573, 1e-05
    %v1583 = vadd.f32 %v1574, 1e-05
    %v1584 = vadd.f32 %v1575, 1e-05
    %v1585 = vadd.f32 %v1576, 1e-05
    %v1586 = vadd.f32 %v1577, 1e-05
    %v1587 = vadd.f32 %v1578, 1e-05
    %v1588 = vrsqrt.pop %v1579
    %v1589 = vmul.f32 %v1588, %v1579
    %v1590 = vmul.f32 %v1589, %v1588
    %v1591 = vmul.f32 0.5, %v1590
    %v1592 = vsub.f32 1.5, %v1591
    %v1593 = vmul.f32 %v1588, %v1592
    %vm1594 = vweird.f32 %v1579
    %vm1595 = vweird.f32 %v1588
    %vm1596 = vmor %vm1594, %vm1595
    %v1597 = vsel %vm1596, %v1588, %v1593
    %v1598 = vrsqrt.pop %v1580
    %v1599 = vmul.f32 %v1598, %v1580
    %v1600 = vmul.f32 %v1599, %v1598
    %v1601 = vmul.f32 0.5, %v1600
    %v1602 = vsub.f32 1.5, %v1601
    %v1603 = vmul.f32 %v1598, %v1602
    %vm1604 = vweird.f32 %v1580
    %vm1605 = vweird.f32 %v1598
    %vm1606 = vmor %vm1604, %vm1605
    %v1607 = vsel %vm1606, %v1598, %v1603
    %v1608 = vrsqrt.pop %v1581
    %v1609 = vmul.f32 %v1608, %v1581
    %v1610 = vmul.f32 %v1609, %v1608
    %v1611 = vmul.f32 0.5, %v1610
    %v1612 = vsub.f32 1.5, %v1611
    %v1613 = vmul.f32 %v1608, %v1612
    %vm1614 = vweird.f32 %v1581
    %vm1615 = vweird.f32 %v1608
    %vm1616 = vmor %vm1614, %vm1615
    %v1617 = vsel %vm1616, %v1608, %v1613
    %v1618 = vrsqrt.pop %v1582
    %v1619 = vmul.f32 %v1618, %v1582
    %v1620 = vmul.f32 %v1619, %v1618
    %v1621 = vmul.f32 0.5, %v1620
    %v1622 = vsub.f32 1.5, %v1621
    %v1623 = vmul.f32 %v1618, %v1622
    %vm1624 = vweird.f32 %v1582
    %vm1625 = vweird.f32 %v1618
    %vm1626 = vmor %vm1624, %vm1625
    %v1627 = vsel %vm1626, %v1618, %v1623
    %v1628 = vrsqrt.pop %v1583
    %v1629 = vmul.f32 %v1628, %v1583
    %v1630 = vmul.f32 %v1629, %v1628
    %v1631 = vmul.f32 0.5, %v1630
    %v1632 = vsub.f32 1.5, %v1631
    %v1633 = vmul.f32 %v1628, %v1632
    %vm1634 = vweird.f32 %v1583
    %vm1635 = vweird.f32 %v1628
    %vm1636 = vmor %vm1634, %vm1635
    %v1637 = vsel %vm1636, %v1628, %v1633
    %v1638 = vrsqrt.pop %v1584
    %v1639 = vmul.f32 %v1638, %v1584
    %v1640 = vmul.f32 %v1639, %v1638
    %v1641 = vmul.f32 0.5, %v1640
    %v1642 = vsub.f32 1.5, %v1641
    %v1643 = vmul.f32 %v1638, %v1642
    %vm1644 = vweird.f32 %v1584
    %vm1645 = vweird.f32 %v1638
    %vm1646 = vmor %vm1644, %vm1645
    %v1647 = vsel %vm1646, %v1638, %v1643
    %v1648 = vrsqrt.pop %v1585
    %v1649 = vmul.f32 %v1648, %v1585
    %v1650 = vmul.f32 %v1649, %v1648
    %v1651 = vmul.f32 0.5, %v1650
    %v1652 = vsub.f32 1.5, %v1651
    %v1653 = vmul.f32 %v1648, %v1652
    %vm1654 = vweird.f32 %v1585
    %vm1655 = vweird.f32 %v1648
    %vm1656 = vmor %vm1654, %vm1655
    %v1657 = vsel %vm1656, %v1648, %v1653
    %v1658 = vrsqrt.pop %v1586
    %v1659 = vmul.f32 %v1658, %v1586
    %v1660 = vmul.f32 %v1659, %v1658
    %v1661 = vmul.f32 0.5, %v1660
    %v1662 = vsub.f32 1.5, %v1661
    %v1663 = vmul.f32 %v1658, %v1662
    %vm1664 = vweird.f32 %v1586
    %vm1665 = vweird.f32 %v1658
    %vm1666 = vmor %vm1664, %vm1665
    %v1667 = vsel %vm1666, %v1658, %v1663
    %v1668 = vrsqrt.pop %v1587
    %v1669 = vmul.f32 %v1668, %v1587
    %v1670 = vmul.f32 %v1669, %v1668
    %v1671 = vmul.f32 0.5, %v1670
    %v1672 = vsub.f32 1.5, %v1671
    %v1673 = vmul.f32 %v1668, %v1672
    %vm1674 = vweird.f32 %v1587
    %vm1675 = vweird.f32 %v1668
    %vm1676 = vmor %vm1674, %vm1675
    %v1677 = vsel %vm1676, %v1668, %v1673
    %1679 = vset.pattern.permute.xlu0 0
    %1680 = vperm.xlu0 %1679, %v1597
    %v1681 = vpop.permute.xlu0 %1680
    %1684 = vset.pattern.permute.xlu0 0
    %1685 = vperm.xlu0 %1684, %v1607
    %v1686 = vpop.permute.xlu0 %1685
    %1689 = vset.pattern.permute.xlu0 0
    %1690 = vperm.xlu0 %1689, %v1617
    %v1691 = vpop.permute.xlu0 %1690
    %1694 = vset.pattern.permute.xlu0 0
    %1695 = vperm.xlu0 %1694, %v1627
    %v1696 = vpop.permute.xlu0 %1695
    %1699 = vset.pattern.permute.xlu0 0
    %1700 = vperm.xlu0 %1699, %v1637
    %v1701 = vpop.permute.xlu0 %1700
    %1704 = vset.pattern.permute.xlu0 0
    %1705 = vperm.xlu0 %1704, %v1647
    %v1706 = vpop.permute.xlu0 %1705
    %1709 = vset.pattern.permute.xlu0 0
    %1710 = vperm.xlu0 %1709, %v1657
    %v1711 = vpop.permute.xlu0 %1710
    %1714 = vset.pattern.permute.xlu0 0
    %1715 = vperm.xlu0 %1714, %v1667
    %v1716 = vpop.permute.xlu0 %1715
    %1719 = vset.pattern.permute.xlu0 0
    %1720 = vperm.xlu0 %1719, %v1677
    %v1721 = vpop.permute.xlu0 %1720
    %v1723 = vmul.f32 %v1405, %v1681
    %v1724 = vmul.f32 %v1406, %v1681
    %v1725 = vmul.f32 %v1407, %v1681
    %v1726 = vmul.f32 %v1408, %v1681
    %v1727 = vmul.f32 %v1409, %v1686
    %v1728 = vmul.f32 %v1410, %v1686
    %v1729 = vmul.f32 %v1411, %v1686
    %v1730 = vmul.f32 %v1412, %v1686
    %v1731 = vmul.f32 %v1413, %v1691
    %v1732 = vmul.f32 %v1414, %v1691
    %v1733 = vmul.f32 %v1415, %v1691
    %v1734 = vmul.f32 %v1416, %v1691
    %v1735 = vmul.f32 %v1417, %v1696
    %v1736 = vmul.f32 %v1418, %v1696
    %v1737 = vmul.f32 %v1419, %v1696
    %v1738 = vmul.f32 %v1420, %v1696
    %v1739 = vmul.f32 %v1421, %v1701
    %v1740 = vmul.f32 %v1422, %v1701
    %v1741 = vmul.f32 %v1423, %v1701
    %v1742 = vmul.f32 %v1424, %v1701
    %v1743 = vmul.f32 %v1425, %v1706
    %v1744 = vmul.f32 %v1426, %v1706
    %v1745 = vmul.f32 %v1427, %v1706
    %v1746 = vmul.f32 %v1428, %v1706
    %v1747 = vmul.f32 %v1429, %v1711
    %v1748 = vmul.f32 %v1430, %v1711
    %v1749 = vmul.f32 %v1431, %v1711
    %v1750 = vmul.f32 %v1432, %v1711
    %v1751 = vmul.f32 %v1433, %v1716
    %v1752 = vmul.f32 %v1434, %v1716
    %v1753 = vmul.f32 %v1435, %v1716
    %v1754 = vmul.f32 %v1436, %v1716
    %v1755 = vmul.f32 %v1437, %v1721
    %v1756 = vmul.f32 %v1438, %v1721
    %v1757 = vmul.f32 %v1439, %v1721
    %v1758 = vmul.f32 %v1440, %v1721
    %v1759 = vld [vmem:[%s4] sm:$0xff]
    %v1760 = vld [vmem:[%s4 + $0x8] sm:$0xff]
    %v1761 = vld [vmem:[%s4 + $0x10] sm:$0xff]
    %v1762 = vld [vmem:[%s4 + $0x18] sm:$0xff]
    %v1763 = vld [vmem:[%s4 + $0x20] sm:$0xff]
    %v1764 = vld [vmem:[%s4 + $0x28] sm:$0xff]
    %v1765 = vld [vmem:[%s4 + $0x30] sm:$0xff]
    %v1766 = vld [vmem:[%s4 + $0x38] sm:$0xff]
    %v1767 = vld [vmem:[%s4 + $0x40] sm:$0x3]
    %1769 = vset.pattern.permute.xlu0 0
    %1770 = vperm.xlu0 %1769, %v1759
    %v1771 = vpop.permute.xlu0 %1770
    %1774 = vset.pattern.permute.xlu0 0
    %1775 = vperm.xlu0 %1774, %v1760
    %v1776 = vpop.permute.xlu0 %1775
    %1779 = vset.pattern.permute.xlu0 0
    %1780 = vperm.xlu0 %1779, %v1761
    %v1781 = vpop.permute.xlu0 %1780
    %1784 = vset.pattern.permute.xlu0 0
    %1785 = vperm.xlu0 %1784, %v1762
    %v1786 = vpop.permute.xlu0 %1785
    %1789 = vset.pattern.permute.xlu0 0
    %1790 = vperm.xlu0 %1789, %v1763
    %v1791 = vpop.permute.xlu0 %1790
    %1794 = vset.pattern.permute.xlu0 0
    %1795 = vperm.xlu0 %1794, %v1764
    %v1796 = vpop.permute.xlu0 %1795
    %1799 = vset.pattern.permute.xlu0 0
    %1800 = vperm.xlu0 %1799, %v1765
    %v1801 = vpop.permute.xlu0 %1800
    %1804 = vset.pattern.permute.xlu0 0
    %1805 = vperm.xlu0 %1804, %v1766
    %v1806 = vpop.permute.xlu0 %1805
    %1809 = vset.pattern.permute.xlu0 0
    %1810 = vperm.xlu0 %1809, %v1767
    %v1811 = vpop.permute.xlu0 %1810
    %v1813 = vmul.f32 %v1723, %v1771
    %v1814 = vmul.f32 %v1724, %v1771
    %v1815 = vmul.f32 %v1725, %v1771
    %v1816 = vmul.f32 %v1726, %v1771
    %v1817 = vmul.f32 %v1727, %v1776
    %v1818 = vmul.f32 %v1728, %v1776
    %v1819 = vmul.f32 %v1729, %v1776
    %v1820 = vmul.f32 %v1730, %v1776
    %v1821 = vmul.f32 %v1731, %v1781
    %v1822 = vmul.f32 %v1732, %v1781
    %v1823 = vmul.f32 %v1733, %v1781
    %v1824 = vmul.f32 %v1734, %v1781
    %v1825 = vmul.f32 %v1735, %v1786
    %v1826 = vmul.f32 %v1736, %v1786
    %v1827 = vmul.f32 %v1737, %v1786
    %v1828 = vmul.f32 %v1738, %v1786
    %v1829 = vmul.f32 %v1739, %v1791
    %v1830 = vmul.f32 %v1740, %v1791
    %v1831 = vmul.f32 %v1741, %v1791
    %v1832 = vmul.f32 %v1742, %v1791
    %v1833 = vmul.f32 %v1743, %v1796
    %v1834 = vmul.f32 %v1744, %v1796
    %v1835 = vmul.f32 %v1745, %v1796
    %v1836 = vmul.f32 %v1746, %v1796
    %v1837 = vmul.f32 %v1747, %v1801
    %v1838 = vmul.f32 %v1748, %v1801
    %v1839 = vmul.f32 %v1749, %v1801
    %v1840 = vmul.f32 %v1750, %v1801
    %v1841 = vmul.f32 %v1751, %v1806
    %v1842 = vmul.f32 %v1752, %v1806
    %v1843 = vmul.f32 %v1753, %v1806
    %v1844 = vmul.f32 %v1754, %v1806
    %v1845 = vmul.f32 %v1755, %v1811
    %v1846 = vmul.f32 %v1756, %v1811
    %v1847 = vmul.f32 %v1757, %v1811
    %v1848 = vmul.f32 %v1758, %v1811
    %v1849 = vld [vmem:[%s5] sm:$0xff]
    %v1850 = vld [vmem:[%s5 + $0x8] sm:$0xff]
    %v1851 = vld [vmem:[%s5 + $0x10] sm:$0xff]
    %v1852 = vld [vmem:[%s5 + $0x18] sm:$0xff]
    %v1853 = vld [vmem:[%s5 + $0x20] sm:$0xff]
    %v1854 = vld [vmem:[%s5 + $0x28] sm:$0xff]
    %v1855 = vld [vmem:[%s5 + $0x30] sm:$0xff]
    %v1856 = vld [vmem:[%s5 + $0x38] sm:$0xff]
    %v1857 = vld [vmem:[%s5 + $0x40] sm:$0x3]
    %1859 = vset.pattern.permute.xlu0 0
    %1860 = vperm.xlu0 %1859, %v1849
    %v1861 = vpop.permute.xlu0 %1860
    %1864 = vset.pattern.permute.xlu0 0
    %1865 = vperm.xlu0 %1864, %v1850
    %v1866 = vpop.permute.xlu0 %1865
    %1869 = vset.pattern.permute.xlu0 0
    %1870 = vperm.xlu0 %1869, %v1851
    %v1871 = vpop.permute.xlu0 %1870
    %1874 = vset.pattern.permute.xlu0 0
    %1875 = vperm.xlu0 %1874, %v1852
    %v1876 = vpop.permute.xlu0 %1875
    %1879 = vset.pattern.permute.xlu0 0
    %1880 = vperm.xlu0 %1879, %v1853
    %v1881 = vpop.permute.xlu0 %1880
    %1884 = vset.pattern.permute.xlu0 0
    %1885 = vperm.xlu0 %1884, %v1854
    %v1886 = vpop.permute.xlu0 %1885
    %1889 = vset.pattern.permute.xlu0 0
    %1890 = vperm.xlu0 %1889, %v1855
    %v1891 = vpop.permute.xlu0 %1890
    %1894 = vset.pattern.permute.xlu0 0
    %1895 = vperm.xlu0 %1894, %v1856
    %v1896 = vpop.permute.xlu0 %1895
    %1899 = vset.pattern.permute.xlu0 0
    %1900 = vperm.xlu0 %1899, %v1857
    %v1901 = vpop.permute.xlu0 %1900
    %v1903 = vadd.f32 %v1813, %v1861
    %v1904 = vadd.f32 %v1814, %v1861
    %v1905 = vadd.f32 %v1815, %v1861
    %v1906 = vadd.f32 %v1816, %v1861
    %v1907 = vadd.f32 %v1817, %v1866
    %v1908 = vadd.f32 %v1818, %v1866
    %v1909 = vadd.f32 %v1819, %v1866
    %v1910 = vadd.f32 %v1820, %v1866
    %v1911 = vadd.f32 %v1821, %v1871
    %v1912 = vadd.f32 %v1822, %v1871
    %v1913 = vadd.f32 %v1823, %v1871
    %v1914 = vadd.f32 %v1824, %v1871
    %v1915 = vadd.f32 %v1825, %v1876
    %v1916 = vadd.f32 %v1826, %v1876
    %v1917 = vadd.f32 %v1827, %v1876
    %v1918 = vadd.f32 %v1828, %v1876
    %v1919 = vadd.f32 %v1829, %v1881
    %v1920 = vadd.f32 %v1830, %v1881
    %v1921 = vadd.f32 %v1831, %v1881
    %v1922 = vadd.f32 %v1832, %v1881
    %v1923 = vadd.f32 %v1833, %v1886
    %v1924 = vadd.f32 %v1834, %v1886
    %v1925 = vadd.f32 %v1835, %v1886
    %v1926 = vadd.f32 %v1836, %v1886
    %v1927 = vadd.f32 %v1837, %v1891
    %v1928 = vadd.f32 %v1838, %v1891
    %v1929 = vadd.f32 %v1839, %v1891
    %v1930 = vadd.f32 %v1840, %v1891
    %v1931 = vadd.f32 %v1841, %v1896
    %v1932 = vadd.f32 %v1842, %v1896
    %v1933 = vadd.f32 %v1843, %v1896
    %v1934 = vadd.f32 %v1844, %v1896
    %v1935 = vadd.f32 %v1845, %v1901
    %v1936 = vadd.f32 %v1846, %v1901
    %v1937 = vadd.f32 %v1847, %v1901
    %v1938 = vadd.f32 %v1848, %v1901
    %v1939 = vpack.c.bf16 %v1907, %v1903
    %v1940 = vpack.c.bf16 %v1908, %v1904
    %v1941 = vpack.c.bf16 %v1909, %v1905
    %v1942 = vpack.c.bf16 %v1910, %v1906
    %v1943 = vpack.c.bf16 %v1915, %v1911
    %v1944 = vpack.c.bf16 %v1916, %v1912
    %v1945 = vpack.c.bf16 %v1917, %v1913
    %v1946 = vpack.c.bf16 %v1918, %v1914
    %v1947 = vpack.c.bf16 %v1923, %v1919
    %v1948 = vpack.c.bf16 %v1924, %v1920
    %v1949 = vpack.c.bf16 %v1925, %v1921
    %v1950 = vpack.c.bf16 %v1926, %v1922
    %v1951 = vpack.c.bf16 %v1931, %v1927
    %v1952 = vpack.c.bf16 %v1932, %v1928
    %v1953 = vpack.c.bf16 %v1933, %v1929
    %v1954 = vpack.c.bf16 %v1934, %v1930
    %v1955 = vpack.c.bf16 %v1935, %v1935
    %v1956 = vpack.c.bf16 %v1936, %v1936
    %v1957 = vpack.c.bf16 %v1937, %v1937
    %v1958 = vpack.c.bf16 %v1938, %v1938
    %v1959 = vld [vmem:[#allocation2 + $0x200] sm:$0xff]
    %v1960 = vld [vmem:[#allocation2 + $0x210] sm:$0xff]
    %v1961 = vld [vmem:[#allocation2 + $0x220] sm:$0xff]
    %v1962 = vld [vmem:[#allocation2 + $0x230] sm:$0xff]
    %v1963 = vld [vmem:[#allocation2 + $0x240] sm:$0xff]
    %v1964 = vld [vmem:[#allocation2 + $0x250] sm:$0xff]
    %v1965 = vld [vmem:[#allocation2 + $0x260] sm:$0xff]
    %v1966 = vld [vmem:[#allocation2 + $0x270] sm:$0xff]
    %v1967 = vld [vmem:[#allocation2 + $0x280] sm:$0xff]
    %v1968 = vld [vmem:[#allocation2 + $0x290] sm:$0xff]
    %v1969 = vld [vmem:[#allocation2 + $0x2a0] sm:$0xff]
    %v1970 = vld [vmem:[#allocation2 + $0x2b0] sm:$0xff]
    %v1971 = vld [vmem:[#allocation2 + $0x2c0] sm:$0xff]
    %v1972 = vld [vmem:[#allocation2 + $0x2d0] sm:$0xff]
    %v1973 = vld [vmem:[#allocation2 + $0x2e0] sm:$0xff]
    %v1974 = vld [vmem:[#allocation2 + $0x2f0] sm:$0xff]
    %v1975 = vld [vmem:[#allocation2 + $0x300] sm:$0xff]
    %v1976 = vld [vmem:[#allocation2 + $0x310] sm:$0xff]
    %v1977 = vld [vmem:[#allocation2 + $0x320] sm:$0xff]
    %v1978 = vld [vmem:[#allocation2 + $0x330] sm:$0xff]
    %v1979 = vld [vmem:[#allocation2 + $0x340] sm:$0xff]
    %v1980 = vld [vmem:[#allocation2 + $0x350] sm:$0xff]
    %v1981 = vld [vmem:[#allocation2 + $0x360] sm:$0xff]
    %v1982 = vld [vmem:[#allocation2 + $0x370] sm:$0xff]
    %v1983 = vld [vmem:[#allocation2 + $0x380] sm:$0xff]
    %v1984 = vld [vmem:[#allocation2 + $0x390] sm:$0xff]
    %v1985 = vld [vmem:[#allocation2 + $0x3a0] sm:$0xff]
    %v1986 = vld [vmem:[#allocation2 + $0x3b0] sm:$0xff]
    %v1987 = vld [vmem:[#allocation2 + $0x3c0] sm:$0xff]
    %v1988 = vld [vmem:[#allocation2 + $0x3d0] sm:$0xff]
    %v1989 = vld [vmem:[#allocation2 + $0x3e0] sm:$0xff]
    %v1990 = vld [vmem:[#allocation2 + $0x3f0] sm:$0xff]
    %v1991 = vld [vmem:[#allocation2 + $0x400] sm:$0xff]
    %v1992 = vld [vmem:[#allocation2 + $0x410] sm:$0xff]
    %v1993 = vld [vmem:[#allocation2 + $0x420] sm:$0xff]
    %v1994 = vld [vmem:[#allocation2 + $0x430] sm:$0xff]
    %v1995 = vld [vmem:[#allocation2 + $0x440] sm:$0xff]
    %v1996 = vld [vmem:[#allocation2 + $0x450] sm:$0xff]
    %v1997 = vld [vmem:[#allocation2 + $0x460] sm:$0xff]
    %v1998 = vld [vmem:[#allocation2 + $0x470] sm:$0xff]
    %v1999 = vld [vmem:[#allocation2 + $0x480] sm:$0xff]
    %v2000 = vld [vmem:[#allocation2 + $0x490] sm:$0xff]
    %v2001 = vld [vmem:[#allocation2 + $0x4a0] sm:$0xff]
    %v2002 = vld [vmem:[#allocation2 + $0x4b0] sm:$0xff]
    %v2003 = vld [vmem:[#allocation2 + $0x4c0] sm:$0xff]
    %v2004 = vld [vmem:[#allocation2 + $0x4d0] sm:$0xff]
    %v2005 = vld [vmem:[#allocation2 + $0x4e0] sm:$0xff]
    %v2006 = vld [vmem:[#allocation2 + $0x4f0] sm:$0xff]
    %v2007 = vld [vmem:[#allocation2 + $0x500] sm:$0xff]
    %v2008 = vld [vmem:[#allocation2 + $0x510] sm:$0xff]
    %v2009 = vld [vmem:[#allocation2 + $0x520] sm:$0xff]
    %v2010 = vld [vmem:[#allocation2 + $0x530] sm:$0xff]
    %v2011 = vld [vmem:[#allocation2 + $0x540] sm:$0xff]
    %v2012 = vld [vmem:[#allocation2 + $0x550] sm:$0xff]
    %v2013 = vld [vmem:[#allocation2 + $0x560] sm:$0xff]
    %v2014 = vld [vmem:[#allocation2 + $0x570] sm:$0xff]
    %v2015 = vld [vmem:[#allocation2 + $0x580] sm:$0xff]
    %v2016 = vld [vmem:[#allocation2 + $0x590] sm:$0xff]
    %v2017 = vld [vmem:[#allocation2 + $0x5a0] sm:$0xff]
    %v2018 = vld [vmem:[#allocation2 + $0x5b0] sm:$0xff]
    %v2019 = vld [vmem:[#allocation2 + $0x5c0] sm:$0xff]
    %v2020 = vld [vmem:[#allocation2 + $0x5d0] sm:$0xff]
    %v2021 = vld [vmem:[#allocation2 + $0x5e0] sm:$0xff]
    %v2022 = vld [vmem:[#allocation2 + $0x5f0] sm:$0xff]
    %v2087 = vunpack.c.l.b16 %v1959
    %v2088 = vunpack.c.h.b16 %v1959
    %v2089 = vunpack.c.l.b16 %v1960
    %v2090 = vunpack.c.h.b16 %v1960
    %v2091 = vunpack.c.l.b16 %v1961
    %v2092 = vunpack.c.h.b16 %v1961
    %v2093 = vunpack.c.l.b16 %v1962
    %v2094 = vunpack.c.h.b16 %v1962
    %v2095 = vunpack.c.l.b16 %v1963
    %v2096 = vunpack.c.h.b16 %v1963
    %v2097 = vunpack.c.l.b16 %v1964
    %v2098 = vunpack.c.h.b16 %v1964
    %v2099 = vunpack.c.l.b16 %v1965
    %v2100 = vunpack.c.h.b16 %v1965
    %v2101 = vunpack.c.l.b16 %v1966
    %v2102 = vunpack.c.h.b16 %v1966
    %v2103 = vunpack.c.l.b16 %v1967
    %v2104 = vunpack.c.h.b16 %v1967
    %v2105 = vunpack.c.l.b16 %v1968
    %v2106 = vunpack.c.h.b16 %v1968
    %v2107 = vunpack.c.l.b16 %v1969
    %v2108 = vunpack.c.h.b16 %v1969
    %v2109 = vunpack.c.l.b16 %v1970
    %v2110 = vunpack.c.h.b16 %v1970
    %v2111 = vunpack.c.l.b16 %v1971
    %v2112 = vunpack.c.h.b16 %v1971
    %v2113 = vunpack.c.l.b16 %v1972
    %v2114 = vunpack.c.h.b16 %v1972
    %v2115 = vunpack.c.l.b16 %v1973
    %v2116 = vunpack.c.h.b16 %v1973
    %v2117 = vunpack.c.l.b16 %v1974
    %v2118 = vunpack.c.h.b16 %v1974
    %v2119 = vunpack.c.l.b16 %v1975
    %v2120 = vunpack.c.h.b16 %v1975
    %v2121 = vunpack.c.l.b16 %v1976
    %v2122 = vunpack.c.h.b16 %v1976
    %v2123 = vunpack.c.l.b16 %v1977
    %v2124 = vunpack.c.h.b16 %v1977
    %v2125 = vunpack.c.l.b16 %v1978
    %v2126 = vunpack.c.h.b16 %v1978
    %v2127 = vunpack.c.l.b16 %v1979
    %v2128 = vunpack.c.h.b16 %v1979
    %v2129 = vunpack.c.l.b16 %v1980
    %v2130 = vunpack.c.h.b16 %v1980
    %v2131 = vunpack.c.l.b16 %v1981
    %v2132 = vunpack.c.h.b16 %v1981
    %v2133 = vunpack.c.l.b16 %v1982
    %v2134 = vunpack.c.h.b16 %v1982
    %v2135 = vunpack.c.l.b16 %v1983
    %v2136 = vunpack.c.h.b16 %v1983
    %v2137 = vunpack.c.l.b16 %v1984
    %v2138 = vunpack.c.h.b16 %v1984
    %v2139 = vunpack.c.l.b16 %v1985
    %v2140 = vunpack.c.h.b16 %v1985
    %v2141 = vunpack.c.l.b16 %v1986
    %v2142 = vunpack.c.h.b16 %v1986
    %v2143 = vunpack.c.l.b16 %v1987
    %v2144 = vunpack.c.h.b16 %v1987
    %v2145 = vunpack.c.l.b16 %v1988
    %v2146 = vunpack.c.h.b16 %v1988
    %v2147 = vunpack.c.l.b16 %v1989
    %v2148 = vunpack.c.h.b16 %v1989
    %v2149 = vunpack.c.l.b16 %v1990
    %v2150 = vunpack.c.h.b16 %v1990
    %v2151 = vunpack.c.l.b16 %v1991
    %v2152 = vunpack.c.h.b16 %v1991
    %v2153 = vunpack.c.l.b16 %v1992
    %v2154 = vunpack.c.h.b16 %v1992
    %v2155 = vunpack.c.l.b16 %v1993
    %v2156 = vunpack.c.h.b16 %v1993
    %v2157 = vunpack.c.l.b16 %v1994
    %v2158 = vunpack.c.h.b16 %v1994
    %v2159 = vunpack.c.l.b16 %v1995
    %v2160 = vunpack.c.h.b16 %v1995
    %v2161 = vunpack.c.l.b16 %v1996
    %v2162 = vunpack.c.h.b16 %v1996
    %v2163 = vunpack.c.l.b16 %v1997
    %v2164 = vunpack.c.h.b16 %v1997
    %v2165 = vunpack.c.l.b16 %v1998
    %v2166 = vunpack.c.h.b16 %v1998
    %v2167 = vunpack.c.l.b16 %v1999
    %v2168 = vunpack.c.h.b16 %v1999
    %v2169 = vunpack.c.l.b16 %v2000
    %v2170 = vunpack.c.h.b16 %v2000
    %v2171 = vunpack.c.l.b16 %v2001
    %v2172 = vunpack.c.h.b16 %v2001
    %v2173 = vunpack.c.l.b16 %v2002
    %v2174 = vunpack.c.h.b16 %v2002
    %v2175 = vunpack.c.l.b16 %v2003
    %v2176 = vunpack.c.h.b16 %v2003
    %v2177 = vunpack.c.l.b16 %v2004
    %v2178 = vunpack.c.h.b16 %v2004
    %v2179 = vunpack.c.l.b16 %v2005
    %v2180 = vunpack.c.h.b16 %v2005
    %v2181 = vunpack.c.l.b16 %v2006
    %v2182 = vunpack.c.h.b16 %v2006
    %v2183 = vunpack.c.l.b16 %v2007
    %v2184 = vunpack.c.h.b16 %v2007
    %v2185 = vunpack.c.l.b16 %v2008
    %v2186 = vunpack.c.h.b16 %v2008
    %v2187 = vunpack.c.l.b16 %v2009
    %v2188 = vunpack.c.h.b16 %v2009
    %v2189 = vunpack.c.l.b16 %v2010
    %v2190 = vunpack.c.h.b16 %v2010
    %v2191 = vunpack.c.l.b16 %v2011
    %v2192 = vunpack.c.h.b16 %v2011
    %v2193 = vunpack.c.l.b16 %v2012
    %v2194 = vunpack.c.h.b16 %v2012
    %v2195 = vunpack.c.l.b16 %v2013
    %v2196 = vunpack.c.h.b16 %v2013
    %v2197 = vunpack.c.l.b16 %v2014
    %v2198 = vunpack.c.h.b16 %v2014
    %v2199 = vunpack.c.l.b16 %v2015
    %v2200 = vunpack.c.h.b16 %v2015
    %v2201 = vunpack.c.l.b16 %v2016
    %v2202 = vunpack.c.h.b16 %v2016
    %v2203 = vunpack.c.l.b16 %v2017
    %v2204 = vunpack.c.h.b16 %v2017
    %v2205 = vunpack.c.l.b16 %v2018
    %v2206 = vunpack.c.h.b16 %v2018
    %v2207 = vunpack.c.l.b16 %v2019
    %v2208 = vunpack.c.h.b16 %v2019
    %v2209 = vunpack.c.l.b16 %v2020
    %v2210 = vunpack.c.h.b16 %v2020
    %v2211 = vunpack.c.l.b16 %v2021
    %v2212 = vunpack.c.h.b16 %v2021
    %v2213 = vunpack.c.l.b16 %v2022
    %v2214 = vunpack.c.h.b16 %v2022
    %v2215 = vpack.c.b16 %v2089, %v2087
    %v2216 = vpack.c.b16 %v2090, %v2088
    %v2217 = vpack.c.b16 %v2093, %v2091
    %v2218 = vpack.c.b16 %v2094, %v2092
    %v2219 = vpack.c.b16 %v2097, %v2095
    %v2220 = vpack.c.b16 %v2098, %v2096
    %v2221 = vpack.c.b16 %v2101, %v2099
    %v2222 = vpack.c.b16 %v2102, %v2100
    %v2223 = vpack.c.b16 %v2105, %v2103
    %v2224 = vpack.c.b16 %v2106, %v2104
    %v2225 = vpack.c.b16 %v2109, %v2107
    %v2226 = vpack.c.b16 %v2110, %v2108
    %v2227 = vpack.c.b16 %v2113, %v2111
    %v2228 = vpack.c.b16 %v2114, %v2112
    %v2229 = vpack.c.b16 %v2117, %v2115
    %v2230 = vpack.c.b16 %v2118, %v2116
    %v2231 = vpack.c.b16 %v2121, %v2119
    %v2232 = vpack.c.b16 %v2122, %v2120
    %v2233 = vpack.c.b16 %v2125, %v2123
    %v2234 = vpack.c.b16 %v2126, %v2124
    %v2235 = vpack.c.b16 %v2129, %v2127
    %v2236 = vpack.c.b16 %v2130, %v2128
    %v2237 = vpack.c.b16 %v2133, %v2131
    %v2238 = vpack.c.b16 %v2134, %v2132
    %v2239 = vpack.c.b16 %v2137, %v2135
    %v2240 = vpack.c.b16 %v2138, %v2136
    %v2241 = vpack.c.b16 %v2141, %v2139
    %v2242 = vpack.c.b16 %v2142, %v2140
    %v2243 = vpack.c.b16 %v2145, %v2143
    %v2244 = vpack.c.b16 %v2146, %v2144
    %v2245 = vpack.c.b16 %v2149, %v2147
    %v2246 = vpack.c.b16 %v2150, %v2148
    %v2247 = vpack.c.b16 %v2153, %v2151
    %v2248 = vpack.c.b16 %v2154, %v2152
    %v2249 = vpack.c.b16 %v2157, %v2155
    %v2250 = vpack.c.b16 %v2158, %v2156
    %v2251 = vpack.c.b16 %v2161, %v2159
    %v2252 = vpack.c.b16 %v2162, %v2160
    %v2253 = vpack.c.b16 %v2165, %v2163
    %v2254 = vpack.c.b16 %v2166, %v2164
    %v2255 = vpack.c.b16 %v2169, %v2167
    %v2256 = vpack.c.b16 %v2170, %v2168
    %v2257 = vpack.c.b16 %v2173, %v2171
    %v2258 = vpack.c.b16 %v2174, %v2172
    %v2259 = vpack.c.b16 %v2177, %v2175
    %v2260 = vpack.c.b16 %v2178, %v2176
    %v2261 = vpack.c.b16 %v2181, %v2179
    %v2262 = vpack.c.b16 %v2182, %v2180
    %v2263 = vpack.c.b16 %v2185, %v2183
    %v2264 = vpack.c.b16 %v2186, %v2184
    %v2265 = vpack.c.b16 %v2189, %v2187
    %v2266 = vpack.c.b16 %v2190, %v2188
    %v2267 = vpack.c.b16 %v2193, %v2191
    %v2268 = vpack.c.b16 %v2194, %v2192
    %v2269 = vpack.c.b16 %v2197, %v2195
    %v2270 = vpack.c.b16 %v2198, %v2196
    %v2271 = vpack.c.b16 %v2201, %v2199
    %v2272 = vpack.c.b16 %v2202, %v2200
    %v2273 = vpack.c.b16 %v2205, %v2203
    %v2274 = vpack.c.b16 %v2206, %v2204
    %v2275 = vpack.c.b16 %v2209, %v2207
    %v2276 = vpack.c.b16 %v2210, %v2208
    %v2277 = vpack.c.b16 %v2213, %v2211
    %v2278 = vpack.c.b16 %v2214, %v2212
    %2343 = vmatpush.bf16.msra.mxu0 %v2229
    %2344 = vmatpush.bf16.msra.mxu0 %v2227
    %2345 = vmatpush.bf16.msra.mxu0 %v2225
    %2346 = vmatpush.bf16.msra.mxu0 %v2223
    %2347 = vmatpush.bf16.msra.mxu0 %v2221
    %2348 = vmatpush.bf16.msra.mxu0 %v2219
    %2349 = vmatpush.bf16.msra.mxu0 %v2217
    %2350 = vmatpush.bf16.msra.mxu0 %v2215
    %2351 = vmatmul.bf16.gmra.mxu0 %v1939
    %v2352 = vpop.f32.mrf.mxu0
    %v2353 = vadd.f32 0.0, %v2352
    %v2354 = vpop.f32.mrf.mxu0
    %v2355 = vadd.f32 0.0, %v2354
    %2356 = vmatmul.bf16.gmra.mxu0 %v1943
    %v2357 = vpop.f32.mrf.mxu0
    %v2358 = vadd.f32 0.0, %v2357
    %v2359 = vpop.f32.mrf.mxu0
    %v2360 = vadd.f32 0.0, %v2359
    %2361 = vmatmul.bf16.gmra.mxu0 %v1947
    %v2362 = vpop.f32.mrf.mxu0
    %v2363 = vadd.f32 0.0, %v2362
    %v2364 = vpop.f32.mrf.mxu0
    %v2365 = vadd.f32 0.0, %v2364
    %2366 = vmatmul.bf16.gmra.mxu0 %v1951
    %v2367 = vpop.f32.mrf.mxu0
    %v2368 = vadd.f32 0.0, %v2367
    %v2369 = vpop.f32.mrf.mxu0
    %v2370 = vadd.f32 0.0, %v2369
    %2371 = vmatmul.bf16.gmra.mxu0 %v1955
    %v2372 = vpop.f32.mrf.mxu0
    %v2373 = vadd.f32 0.0, %v2372
    %v2374 = vpop.f32.mrf.mxu0
    %2375 = vdwg.mxu0
    %2376 = vmatpush.bf16.msra.mxu0 %v2245
    %2377 = vmatpush.bf16.msra.mxu0 %v2243
    %2378 = vmatpush.bf16.msra.mxu0 %v2241
    %2379 = vmatpush.bf16.msra.mxu0 %v2239
    %2380 = vmatpush.bf16.msra.mxu0 %v2237
    %2381 = vmatpush.bf16.msra.mxu0 %v2235
    %2382 = vmatpush.bf16.msra.mxu0 %v2233
    %2383 = vmatpush.bf16.msra.mxu0 %v2231
    %2384 = vmatmul.bf16.gmra.mxu0 %v1940
    %v2385 = vpop.f32.mrf.mxu0
    %v2386 = vadd.f32 %v2353, %v2385
    %v2387 = vpop.f32.mrf.mxu0
    %v2388 = vadd.f32 %v2355, %v2387
    %2389 = vmatmul.bf16.gmra.mxu0 %v1944
    %v2390 = vpop.f32.mrf.mxu0
    %v2391 = vadd.f32 %v2358, %v2390
    %v2392 = vpop.f32.mrf.mxu0
    %v2393 = vadd.f32 %v2360, %v2392
    %2394 = vmatmul.bf16.gmra.mxu0 %v1948
    %v2395 = vpop.f32.mrf.mxu0
    %v2396 = vadd.f32 %v2363, %v2395
    %v2397 = vpop.f32.mrf.mxu0
    %v2398 = vadd.f32 %v2365, %v2397
    %2399 = vmatmul.bf16.gmra.mxu0 %v1952
    %v2400 = vpop.f32.mrf.mxu0
    %v2401 = vadd.f32 %v2368, %v2400
    %v2402 = vpop.f32.mrf.mxu0
    %v2403 = vadd.f32 %v2370, %v2402
    %2404 = vmatmul.bf16.gmra.mxu0 %v1956
    %v2405 = vpop.f32.mrf.mxu0
    %v2406 = vadd.f32 %v2373, %v2405
    %v2407 = vpop.f32.mrf.mxu0
    %2408 = vdwg.mxu0
    %2409 = vmatpush.bf16.msra.mxu0 %v2261
    %2410 = vmatpush.bf16.msra.mxu0 %v2259
    %2411 = vmatpush.bf16.msra.mxu0 %v2257
    %2412 = vmatpush.bf16.msra.mxu0 %v2255
    %2413 = vmatpush.bf16.msra.mxu0 %v2253
    %2414 = vmatpush.bf16.msra.mxu0 %v2251
    %2415 = vmatpush.bf16.msra.mxu0 %v2249
    %2416 = vmatpush.bf16.msra.mxu0 %v2247
    %2417 = vmatmul.bf16.gmra.mxu0 %v1941
    %v2418 = vpop.f32.mrf.mxu0
    %v2419 = vadd.f32 %v2386, %v2418
    %v2420 = vpop.f32.mrf.mxu0
    %v2421 = vadd.f32 %v2388, %v2420
    %2422 = vmatmul.bf16.gmra.mxu0 %v1945
    %v2423 = vpop.f32.mrf.mxu0
    %v2424 = vadd.f32 %v2391, %v2423
    %v2425 = vpop.f32.mrf.mxu0
    %v2426 = vadd.f32 %v2393, %v2425
    %2427 = vmatmul.bf16.gmra.mxu0 %v1949
    %v2428 = vpop.f32.mrf.mxu0
    %v2429 = vadd.f32 %v2396, %v2428
    %v2430 = vpop.f32.mrf.mxu0
    %v2431 = vadd.f32 %v2398, %v2430
    %2432 = vmatmul.bf16.gmra.mxu0 %v1953
    %v2433 = vpop.f32.mrf.mxu0
    %v2434 = vadd.f32 %v2401, %v2433
    %v2435 = vpop.f32.mrf.mxu0
    %v2436 = vadd.f32 %v2403, %v2435
    %2437 = vmatmul.bf16.gmra.mxu0 %v1957
    %v2438 = vpop.f32.mrf.mxu0
    %v2439 = vadd.f32 %v2406, %v2438
    %v2440 = vpop.f32.mrf.mxu0
    %2441 = vdwg.mxu0
    %2442 = vmatpush.bf16.msra.mxu0 %v2277
    %2443 = vmatpush.bf16.msra.mxu0 %v2275
    %2444 = vmatpush.bf16.msra.mxu0 %v2273
    %2445 = vmatpush.bf16.msra.mxu0 %v2271
    %2446 = vmatpush.bf16.msra.mxu0 %v2269
    %2447 = vmatpush.bf16.msra.mxu0 %v2267
    %2448 = vmatpush.bf16.msra.mxu0 %v2265
    %2449 = vmatpush.bf16.msra.mxu0 %v2263
    %2450 = vmatmul.bf16.gmra.mxu0 %v1942
    %v2451 = vpop.f32.mrf.mxu0
    %v2452 = vadd.f32 %v2419, %v2451
    %v2453 = vpop.f32.mrf.mxu0
    %v2454 = vadd.f32 %v2421, %v2453
    %2455 = vmatmul.bf16.gmra.mxu0 %v1946
    %v2456 = vpop.f32.mrf.mxu0
    %v2457 = vadd.f32 %v2424, %v2456
    %v2458 = vpop.f32.mrf.mxu0
    %v2459 = vadd.f32 %v2426, %v2458
    %2460 = vmatmul.bf16.gmra.mxu0 %v1950
    %v2461 = vpop.f32.mrf.mxu0
    %v2462 = vadd.f32 %v2429, %v2461
    %v2463 = vpop.f32.mrf.mxu0
    %v2464 = vadd.f32 %v2431, %v2463
    %2465 = vmatmul.bf16.gmra.mxu0 %v1954
    %v2466 = vpop.f32.mrf.mxu0
    %v2467 = vadd.f32 %v2434, %v2466
    %v2468 = vpop.f32.mrf.mxu0
    %v2469 = vadd.f32 %v2436, %v2468
    %2470 = vmatmul.bf16.gmra.mxu0 %v1958
    %v2471 = vpop.f32.mrf.mxu0
    %v2472 = vadd.f32 %v2439, %v2471
    %v2473 = vpop.f32.mrf.mxu0
    %2474 = vdwg.mxu0
    %2475 = vmatpush.bf16.msra.mxu0 %v2230
    %2476 = vmatpush.bf16.msra.mxu0 %v2228
    %2477 = vmatpush.bf16.msra.mxu0 %v2226
    %2478 = vmatpush.bf16.msra.mxu0 %v2224
    %2479 = vmatpush.bf16.msra.mxu0 %v2222
    %2480 = vmatpush.bf16.msra.mxu0 %v2220
    %2481 = vmatpush.bf16.msra.mxu0 %v2218
    %2482 = vmatpush.bf16.msra.mxu0 %v2216
    %2483 = vmatmul.bf16.gmra.mxu0 %v1939
    %v2484 = vpop.f32.mrf.mxu0
    %v2485 = vadd.f32 0.0, %v2484
    %v2486 = vpop.f32.mrf.mxu0
    %v2487 = vadd.f32 0.0, %v2486
    %2488 = vmatmul.bf16.gmra.mxu0 %v1943
    %v2489 = vpop.f32.mrf.mxu0
    %v2490 = vadd.f32 0.0, %v2489
    %v2491 = vpop.f32.mrf.mxu0
    %v2492 = vadd.f32 0.0, %v2491
    %2493 = vmatmul.bf16.gmra.mxu0 %v1947
    %v2494 = vpop.f32.mrf.mxu0
    %v2495 = vadd.f32 0.0, %v2494
    %v2496 = vpop.f32.mrf.mxu0
    %v2497 = vadd.f32 0.0, %v2496
    %2498 = vmatmul.bf16.gmra.mxu0 %v1951
    %v2499 = vpop.f32.mrf.mxu0
    %v2500 = vadd.f32 0.0, %v2499
    %v2501 = vpop.f32.mrf.mxu0
    %v2502 = vadd.f32 0.0, %v2501
    %2503 = vmatmul.bf16.gmra.mxu0 %v1955
    %v2504 = vpop.f32.mrf.mxu0
    %v2505 = vadd.f32 0.0, %v2504
    %v2506 = vpop.f32.mrf.mxu0
    %2507 = vdwg.mxu0
    %2508 = vmatpush.bf16.msra.mxu0 %v2246
    %2509 = vmatpush.bf16.msra.mxu0 %v2244
    %2510 = vmatpush.bf16.msra.mxu0 %v2242
    %2511 = vmatpush.bf16.msra.mxu0 %v2240
    %2512 = vmatpush.bf16.msra.mxu0 %v2238
    %2513 = vmatpush.bf16.msra.mxu0 %v2236
    %2514 = vmatpush.bf16.msra.mxu0 %v2234
    %2515 = vmatpush.bf16.msra.mxu0 %v2232
    %2516 = vmatmul.bf16.gmra.mxu0 %v1940
    %v2517 = vpop.f32.mrf.mxu0
    %v2518 = vadd.f32 %v2485, %v2517
    %v2519 = vpop.f32.mrf.mxu0
    %v2520 = vadd.f32 %v2487, %v2519
    %2521 = vmatmul.bf16.gmra.mxu0 %v1944
    %v2522 = vpop.f32.mrf.mxu0
    %v2523 = vadd.f32 %v2490, %v2522
    %v2524 = vpop.f32.mrf.mxu0
    %v2525 = vadd.f32 %v2492, %v2524
    %2526 = vmatmul.bf16.gmra.mxu0 %v1948
    %v2527 = vpop.f32.mrf.mxu0
    %v2528 = vadd.f32 %v2495, %v2527
    %v2529 = vpop.f32.mrf.mxu0
    %v2530 = vadd.f32 %v2497, %v2529
    %2531 = vmatmul.bf16.gmra.mxu0 %v1952
    %v2532 = vpop.f32.mrf.mxu0
    %v2533 = vadd.f32 %v2500, %v2532
    %v2534 = vpop.f32.mrf.mxu0
    %v2535 = vadd.f32 %v2502, %v2534
    %2536 = vmatmul.bf16.gmra.mxu0 %v1956
    %v2537 = vpop.f32.mrf.mxu0
    %v2538 = vadd.f32 %v2505, %v2537
    %v2539 = vpop.f32.mrf.mxu0
    %2540 = vdwg.mxu0
    %2541 = vmatpush.bf16.msra.mxu0 %v2262
    %2542 = vmatpush.bf16.msra.mxu0 %v2260
    %2543 = vmatpush.bf16.msra.mxu0 %v2258
    %2544 = vmatpush.bf16.msra.mxu0 %v2256
    %2545 = vmatpush.bf16.msra.mxu0 %v2254
    %2546 = vmatpush.bf16.msra.mxu0 %v2252
    %2547 = vmatpush.bf16.msra.mxu0 %v2250
    %2548 = vmatpush.bf16.msra.mxu0 %v2248
    %2549 = vmatmul.bf16.gmra.mxu0 %v1941
    %v2550 = vpop.f32.mrf.mxu0
    %v2551 = vadd.f32 %v2518, %v2550
    %v2552 = vpop.f32.mrf.mxu0
    %v2553 = vadd.f32 %v2520, %v2552
    %2554 = vmatmul.bf16.gmra.mxu0 %v1945
    %v2555 = vpop.f32.mrf.mxu0
    %v2556 = vadd.f32 %v2523, %v2555
    %v2557 = vpop.f32.mrf.mxu0
    %v2558 = vadd.f32 %v2525, %v2557
    %2559 = vmatmul.bf16.gmra.mxu0 %v1949
    %v2560 = vpop.f32.mrf.mxu0
    %v2561 = vadd.f32 %v2528, %v2560
    %v2562 = vpop.f32.mrf.mxu0
    %v2563 = vadd.f32 %v2530, %v2562
    %2564 = vmatmul.bf16.gmra.mxu0 %v1953
    %v2565 = vpop.f32.mrf.mxu0
    %v2566 = vadd.f32 %v2533, %v2565
    %v2567 = vpop.f32.mrf.mxu0
    %v2568 = vadd.f32 %v2535, %v2567
    %2569 = vmatmul.bf16.gmra.mxu0 %v1957
    %v2570 = vpop.f32.mrf.mxu0
    %v2571 = vadd.f32 %v2538, %v2570
    %v2572 = vpop.f32.mrf.mxu0
    %2573 = vdwg.mxu0
    %2574 = vmatpush.bf16.msra.mxu0 %v2278
    %2575 = vmatpush.bf16.msra.mxu0 %v2276
    %2576 = vmatpush.bf16.msra.mxu0 %v2274
    %2577 = vmatpush.bf16.msra.mxu0 %v2272
    %2578 = vmatpush.bf16.msra.mxu0 %v2270
    %2579 = vmatpush.bf16.msra.mxu0 %v2268
    %2580 = vmatpush.bf16.msra.mxu0 %v2266
    %2581 = vmatpush.bf16.msra.mxu0 %v2264
    %2582 = vmatmul.bf16.gmra.mxu0 %v1942
    %v2583 = vpop.f32.mrf.mxu0
    %v2584 = vadd.f32 %v2551, %v2583
    %v2585 = vpop.f32.mrf.mxu0
    %v2586 = vadd.f32 %v2553, %v2585
    %2587 = vmatmul.bf16.gmra.mxu0 %v1946
    %v2588 = vpop.f32.mrf.mxu0
    %v2589 = vadd.f32 %v2556, %v2588
    %v2590 = vpop.f32.mrf.mxu0
    %v2591 = vadd.f32 %v2558, %v2590
    %2592 = vmatmul.bf16.gmra.mxu0 %v1950
    %v2593 = vpop.f32.mrf.mxu0
    %v2594 = vadd.f32 %v2561, %v2593
    %v2595 = vpop.f32.mrf.mxu0
    %v2596 = vadd.f32 %v2563, %v2595
    %2597 = vmatmul.bf16.gmra.mxu0 %v1954
    %v2598 = vpop.f32.mrf.mxu0
    %v2599 = vadd.f32 %v2566, %v2598
    %v2600 = vpop.f32.mrf.mxu0
    %v2601 = vadd.f32 %v2568, %v2600
    %2602 = vmatmul.bf16.gmra.mxu0 %v1958
    %v2603 = vpop.f32.mrf.mxu0
    %v2604 = vadd.f32 %v2571, %v2603
    %v2605 = vpop.f32.mrf.mxu0
    %2606 = vdwg.mxu0
    %v2607 = vpack.c.bf16 %v2454, %v2452
    %v2608 = vpack.c.bf16 %v2586, %v2584
    %v2609 = vpack.c.bf16 %v2459, %v2457
    %v2610 = vpack.c.bf16 %v2591, %v2589
    %v2611 = vpack.c.bf16 %v2464, %v2462
    %v2612 = vpack.c.bf16 %v2596, %v2594
    %v2613 = vpack.c.bf16 %v2469, %v2467
    %v2614 = vpack.c.bf16 %v2601, %v2599
    %v2615 = vpack.c.bf16 %v2472, %v2472
    %v2616 = vpack.c.bf16 %v2604, %v2604
    %v2617 = vld [vmem:[%s3 + $0x7] sm:$0x3]
    %v2619 = vperm.slane %v2617, 0
    %v2620 = vperm.slane %v2617, 1
    %v2624 = vsel %vm110, %v2615, 0
    %v2627 = vsel %vm110, %v2616, 0
    %2629 = vmatpush.bf16.msra.mxu0 0
    %2630 = vmatpush.bf16.msra.mxu0 0
    %2631 = vmatpush.bf16.msra.mxu0 0
    %2632 = vmatpush.bf16.msra.mxu0 %v2624
    %2633 = vmatpush.bf16.msra.mxu0 %v2613
    %2634 = vmatpush.bf16.msra.mxu0 %v2611
    %2635 = vmatpush.bf16.msra.mxu0 %v2609
    %2636 = vmatpush.bf16.msra.mxu0 %v2607
    %2637 = vmatmul.bf16.gmra.mxu0 %v96
    %v2638 = vpop.f32.mrf.mxu0
    %v2639 = vadd.f32 %v2619, %v2638
    %v2640 = vpop.f32.mrf.mxu0
    %v2641 = vadd.f32 %v2619, %v2640
    %2642 = vmatmul.bf16.gmra.mxu0 %v99
    %v2643 = vpop.f32.mrf.mxu0
    %v2644 = vadd.f32 %v2619, %v2643
    %v2645 = vpop.f32.mrf.mxu0
    %v2646 = vadd.f32 %v2619, %v2645
    %2647 = vmatmul.bf16.gmra.mxu0 %v102
    %v2648 = vpop.f32.mrf.mxu0
    %v2649 = vadd.f32 %v2619, %v2648
    %v2650 = vpop.f32.mrf.mxu0
    %v2651 = vadd.f32 %v2619, %v2650
    %2652 = vmatmul.bf16.gmra.mxu0 %v105
    %v2653 = vpop.f32.mrf.mxu0
    %v2654 = vadd.f32 %v2619, %v2653
    %v2655 = vpop.f32.mrf.mxu0
    %v2656 = vadd.f32 %v2619, %v2655
    %2657 = vmatmul.bf16.gmra.mxu0 %v108
    %v2658 = vpop.f32.mrf.mxu0
    %v2659 = vadd.f32 %v2619, %v2658
    %v2660 = vpop.f32.mrf.mxu0
    %2661 = vdwg.mxu0
    %2662 = vmatpush.bf16.msra.mxu0 0
    %2663 = vmatpush.bf16.msra.mxu0 0
    %2664 = vmatpush.bf16.msra.mxu0 0
    %2665 = vmatpush.bf16.msra.mxu0 %v2627
    %2666 = vmatpush.bf16.msra.mxu0 %v2614
    %2667 = vmatpush.bf16.msra.mxu0 %v2612
    %2668 = vmatpush.bf16.msra.mxu0 %v2610
    %2669 = vmatpush.bf16.msra.mxu0 %v2608
    %2670 = vmatmul.bf16.gmra.mxu0 %v96
    %v2671 = vpop.f32.mrf.mxu0
    %v2672 = vadd.f32 %v2620, %v2671
    %v2673 = vpop.f32.mrf.mxu0
    %v2674 = vadd.f32 %v2620, %v2673
    %2675 = vmatmul.bf16.gmra.mxu0 %v99
    %v2676 = vpop.f32.mrf.mxu0
    %v2677 = vadd.f32 %v2620, %v2676
    %v2678 = vpop.f32.mrf.mxu0
    %v2679 = vadd.f32 %v2620, %v2678
    %2680 = vmatmul.bf16.gmra.mxu0 %v102
    %v2681 = vpop.f32.mrf.mxu0
    %v2682 = vadd.f32 %v2620, %v2681
    %v2683 = vpop.f32.mrf.mxu0
    %v2684 = vadd.f32 %v2620, %v2683
    %2685 = vmatmul.bf16.gmra.mxu0 %v105
    %v2686 = vpop.f32.mrf.mxu0
    %v2687 = vadd.f32 %v2620, %v2686
    %v2688 = vpop.f32.mrf.mxu0
    %v2689 = vadd.f32 %v2620, %v2688
    %2690 = vmatmul.bf16.gmra.mxu0 %v108
    %v2691 = vpop.f32.mrf.mxu0
    %v2692 = vadd.f32 %v2620, %v2691
    %v2693 = vpop.f32.mrf.mxu0
    %2694 = vdwg.mxu0
    %v2695 = vmax.f32 %v2639, 0.0
    %v2696 = vmax.f32 %v2672, 0.0
    %v2697 = vmax.f32 %v2641, 0.0
    %v2698 = vmax.f32 %v2674, 0.0
    %v2699 = vmax.f32 %v2644, 0.0
    %v2700 = vmax.f32 %v2677, 0.0
    %v2701 = vmax.f32 %v2646, 0.0
    %v2702 = vmax.f32 %v2679, 0.0
    %v2703 = vmax.f32 %v2649, 0.0
    %v2704 = vmax.f32 %v2682, 0.0
    %v2705 = vmax.f32 %v2651, 0.0
    %v2706 = vmax.f32 %v2684, 0.0
    %v2707 = vmax.f32 %v2654, 0.0
    %v2708 = vmax.f32 %v2687, 0.0
    %v2709 = vmax.f32 %v2656, 0.0
    %v2710 = vmax.f32 %v2689, 0.0
    %v2711 = vmax.f32 %v2659, 0.0
    %v2712 = vmax.f32 %v2692, 0.0
    %v2713 = vpack.c.bf16 %v2697, %v2695
    %v2714 = vpack.c.bf16 %v2698, %v2696
    %v2715 = vpack.c.bf16 %v2701, %v2699
    %v2716 = vpack.c.bf16 %v2702, %v2700
    %v2717 = vpack.c.bf16 %v2705, %v2703
    %v2718 = vpack.c.bf16 %v2706, %v2704
    %v2719 = vpack.c.bf16 %v2709, %v2707
    %v2720 = vpack.c.bf16 %v2710, %v2708
    %v2721 = vpack.c.bf16 %v2711, %v2711
    %v2722 = vpack.c.bf16 %v2712, %v2712
    %v2723 = vld [vmem:[#allocation2 + $0x308] sm:$0xf]
    %v2724 = vld [vmem:[#allocation2 + $0x318] sm:$0xf]
    %v2725 = vld [vmem:[#allocation2 + $0x328] sm:$0xf]
    %v2726 = vld [vmem:[#allocation2 + $0x338] sm:$0xf]
    %v2727 = vld [vmem:[#allocation2 + $0x348] sm:$0xf]
    %v2728 = vld [vmem:[#allocation2 + $0x358] sm:$0xf]
    %v2729 = vld [vmem:[#allocation2 + $0x368] sm:$0xf]
    %v2730 = vld [vmem:[#allocation2 + $0x378] sm:$0xf]
    %v2731 = vld [vmem:[#allocation2 + $0x388] sm:$0xf]
    %v2732 = vld [vmem:[#allocation2 + $0x398] sm:$0xf]
    %v2733 = vld [vmem:[#allocation2 + $0x3a8] sm:$0xf]
    %v2734 = vld [vmem:[#allocation2 + $0x3b8] sm:$0xf]
    %v2735 = vld [vmem:[#allocation2 + $0x3c8] sm:$0xf]
    %v2736 = vld [vmem:[#allocation2 + $0x3d8] sm:$0xf]
    %v2737 = vld [vmem:[#allocation2 + $0x3e8] sm:$0xf]
    %v2738 = vld [vmem:[#allocation2 + $0x3f8] sm:$0xf]
    %v2739 = vld [vmem:[#allocation2 + $0x408] sm:$0xf]
    %v2740 = vld [vmem:[#allocation2 + $0x418] sm:$0xf]
    %v2741 = vld [vmem:[#allocation2 + $0x428] sm:$0xf]
    %v2742 = vld [vmem:[#allocation2 + $0x438] sm:$0xf]
    %v2743 = vld [vmem:[#allocation2 + $0x448] sm:$0xf]
    %v2744 = vld [vmem:[#allocation2 + $0x458] sm:$0xf]
    %v2745 = vld [vmem:[#allocation2 + $0x468] sm:$0xf]
    %v2746 = vld [vmem:[#allocation2 + $0x478] sm:$0xf]
    %v2747 = vld [vmem:[#allocation2 + $0x488] sm:$0xf]
    %v2748 = vld [vmem:[#allocation2 + $0x498] sm:$0xf]
    %v2749 = vld [vmem:[#allocation2 + $0x4a8] sm:$0xf]
    %v2750 = vld [vmem:[#allocation2 + $0x4b8] sm:$0xf]
    %v2751 = vld [vmem:[#allocation2 + $0x4c8] sm:$0xf]
    %v2752 = vld [vmem:[#allocation2 + $0x4d8] sm:$0xf]
    %v2753 = vld [vmem:[#allocation2 + $0x4e8] sm:$0xf]
    %v2754 = vld [vmem:[#allocation2 + $0x4f8] sm:$0xf]
    %v2787 = vunpack.c.l.b16 %v2723
    %v2788 = vunpack.c.l.b16 %v2724
    %v2789 = vunpack.c.l.b16 %v2725
    %v2790 = vunpack.c.l.b16 %v2726
    %v2791 = vunpack.c.l.b16 %v2727
    %v2792 = vunpack.c.l.b16 %v2728
    %v2793 = vunpack.c.l.b16 %v2729
    %v2794 = vunpack.c.l.b16 %v2730
    %v2795 = vunpack.c.l.b16 %v2731
    %v2796 = vunpack.c.l.b16 %v2732
    %v2797 = vunpack.c.l.b16 %v2733
    %v2798 = vunpack.c.l.b16 %v2734
    %v2799 = vunpack.c.l.b16 %v2735
    %v2800 = vunpack.c.l.b16 %v2736
    %v2801 = vunpack.c.l.b16 %v2737
    %v2802 = vunpack.c.l.b16 %v2738
    %v2803 = vunpack.c.l.b16 %v2739
    %v2804 = vunpack.c.l.b16 %v2740
    %v2805 = vunpack.c.l.b16 %v2741
    %v2806 = vunpack.c.l.b16 %v2742
    %v2807 = vunpack.c.l.b16 %v2743
    %v2808 = vunpack.c.l.b16 %v2744
    %v2809 = vunpack.c.l.b16 %v2745
    %v2810 = vunpack.c.l.b16 %v2746
    %v2811 = vunpack.c.l.b16 %v2747
    %v2812 = vunpack.c.l.b16 %v2748
    %v2813 = vunpack.c.l.b16 %v2749
    %v2814 = vunpack.c.l.b16 %v2750
    %v2815 = vunpack.c.l.b16 %v2751
    %v2816 = vunpack.c.l.b16 %v2752
    %v2817 = vunpack.c.l.b16 %v2753
    %v2818 = vunpack.c.l.b16 %v2754
    %v2819 = vpack.c.b16 %v2788, %v2787
    %v2820 = vpack.c.b16 %v2790, %v2789
    %v2821 = vpack.c.b16 %v2792, %v2791
    %v2822 = vpack.c.b16 %v2794, %v2793
    %v2823 = vpack.c.b16 %v2796, %v2795
    %v2824 = vpack.c.b16 %v2798, %v2797
    %v2825 = vpack.c.b16 %v2800, %v2799
    %v2826 = vpack.c.b16 %v2802, %v2801
    %v2827 = vpack.c.b16 %v2804, %v2803
    %v2828 = vpack.c.b16 %v2806, %v2805
    %v2829 = vpack.c.b16 %v2808, %v2807
    %v2830 = vpack.c.b16 %v2810, %v2809
    %v2831 = vpack.c.b16 %v2812, %v2811
    %v2832 = vpack.c.b16 %v2814, %v2813
    %v2833 = vpack.c.b16 %v2816, %v2815
    %v2834 = vpack.c.b16 %v2818, %v2817
    %2851 = vmatpush.bf16.msra.mxu0 %v2826
    %2852 = vmatpush.bf16.msra.mxu0 %v2825
    %2853 = vmatpush.bf16.msra.mxu0 %v2824
    %2854 = vmatpush.bf16.msra.mxu0 %v2823
    %2855 = vmatpush.bf16.msra.mxu0 %v2822
    %2856 = vmatpush.bf16.msra.mxu0 %v2821
    %2857 = vmatpush.bf16.msra.mxu0 %v2820
    %2858 = vmatpush.bf16.msra.mxu0 %v2819
    %2859 = vmatmul.bf16.gmra.mxu0 %v2713
    %v2860 = vpop.f32.mrf.mxu0
    %v2861 = vadd.f32 0.0, %v2860
    %v2862 = vpop.f32.mrf.mxu0
    %v2863 = vadd.f32 0.0, %v2862
    %2864 = vmatmul.bf16.gmra.mxu0 %v2715
    %v2865 = vpop.f32.mrf.mxu0
    %v2866 = vadd.f32 0.0, %v2865
    %v2867 = vpop.f32.mrf.mxu0
    %v2868 = vadd.f32 0.0, %v2867
    %2869 = vmatmul.bf16.gmra.mxu0 %v2717
    %v2870 = vpop.f32.mrf.mxu0
    %v2871 = vadd.f32 0.0, %v2870
    %v2872 = vpop.f32.mrf.mxu0
    %v2873 = vadd.f32 0.0, %v2872
    %2874 = vmatmul.bf16.gmra.mxu0 %v2719
    %v2875 = vpop.f32.mrf.mxu0
    %v2876 = vadd.f32 0.0, %v2875
    %v2877 = vpop.f32.mrf.mxu0
    %v2878 = vadd.f32 0.0, %v2877
    %2879 = vmatmul.bf16.gmra.mxu0 %v2721
    %v2880 = vpop.f32.mrf.mxu0
    %v2881 = vadd.f32 0.0, %v2880
    %v2882 = vpop.f32.mrf.mxu0
    %2883 = vdwg.mxu0
    %2884 = vmatpush.bf16.msra.mxu0 %v2834
    %2885 = vmatpush.bf16.msra.mxu0 %v2833
    %2886 = vmatpush.bf16.msra.mxu0 %v2832
    %2887 = vmatpush.bf16.msra.mxu0 %v2831
    %2888 = vmatpush.bf16.msra.mxu0 %v2830
    %2889 = vmatpush.bf16.msra.mxu0 %v2829
    %2890 = vmatpush.bf16.msra.mxu0 %v2828
    %2891 = vmatpush.bf16.msra.mxu0 %v2827
    %2892 = vmatmul.bf16.gmra.mxu0 %v2714
    %v2893 = vpop.f32.mrf.mxu0
    %v2894 = vadd.f32 %v2861, %v2893
    %v2895 = vpop.f32.mrf.mxu0
    %v2896 = vadd.f32 %v2863, %v2895
    %2897 = vmatmul.bf16.gmra.mxu0 %v2716
    %v2898 = vpop.f32.mrf.mxu0
    %v2899 = vadd.f32 %v2866, %v2898
    %v2900 = vpop.f32.mrf.mxu0
    %v2901 = vadd.f32 %v2868, %v2900
    %2902 = vmatmul.bf16.gmra.mxu0 %v2718
    %v2903 = vpop.f32.mrf.mxu0
    %v2904 = vadd.f32 %v2871, %v2903
    %v2905 = vpop.f32.mrf.mxu0
    %v2906 = vadd.f32 %v2873, %v2905
    %2907 = vmatmul.bf16.gmra.mxu0 %v2720
    %v2908 = vpop.f32.mrf.mxu0
    %v2909 = vadd.f32 %v2876, %v2908
    %v2910 = vpop.f32.mrf.mxu0
    %v2911 = vadd.f32 %v2878, %v2910
    %2912 = vmatmul.bf16.gmra.mxu0 %v2722
    %v2913 = vpop.f32.mrf.mxu0
    %v2914 = vadd.f32 %v2881, %v2913
    %v2915 = vpop.f32.mrf.mxu0
    %2916 = vdwg.mxu0
    %v2917 = vpack.c.bf16 %v2896, %v2894
    %v2918 = vpack.c.bf16 %v2901, %v2899
    %v2919 = vpack.c.bf16 %v2906, %v2904
    %v2920 = vpack.c.bf16 %v2911, %v2909
    %v2921 = vpack.c.bf16 %v2914, %v2914
    %v2922 = vld [vmem:[%s3 + $0x9] sm:$0x1]
    %v2924 = vperm.slane %v2922, 0
    %v2927 = vsel %vm110, %v2921, 0
    %2929 = vmatpush.bf16.msra.mxu0 0
    %2930 = vmatpush.bf16.msra.mxu0 0
    %2931 = vmatpush.bf16.msra.mxu0 0
    %2932 = vmatpush.bf16.msra.mxu0 %v2927
    %2933 = vmatpush.bf16.msra.mxu0 %v2920
    %2934 = vmatpush.bf16.msra.mxu0 %v2919
    %2935 = vmatpush.bf16.msra.mxu0 %v2918
    %2936 = vmatpush.bf16.msra.mxu0 %v2917
    %2937 = vmatmul.bf16.gmra.mxu0 %v96
    %v2938 = vpop.f32.mrf.mxu0
    %v2939 = vadd.f32 %v2924, %v2938
    %v2940 = vpop.f32.mrf.mxu0
    %v2941 = vadd.f32 %v2924, %v2940
    %2942 = vmatmul.bf16.gmra.mxu0 %v99
    %v2943 = vpop.f32.mrf.mxu0
    %v2944 = vadd.f32 %v2924, %v2943
    %v2945 = vpop.f32.mrf.mxu0
    %v2946 = vadd.f32 %v2924, %v2945
    %2947 = vmatmul.bf16.gmra.mxu0 %v102
    %v2948 = vpop.f32.mrf.mxu0
    %v2949 = vadd.f32 %v2924, %v2948
    %v2950 = vpop.f32.mrf.mxu0
    %v2951 = vadd.f32 %v2924, %v2950
    %2952 = vmatmul.bf16.gmra.mxu0 %v105
    %v2953 = vpop.f32.mrf.mxu0
    %v2954 = vadd.f32 %v2924, %v2953
    %v2955 = vpop.f32.mrf.mxu0
    %v2956 = vadd.f32 %v2924, %v2955
    %2957 = vmatmul.bf16.gmra.mxu0 %v108
    %v2958 = vpop.f32.mrf.mxu0
    %v2959 = vadd.f32 %v2924, %v2958
    %v2960 = vpop.f32.mrf.mxu0
    %2961 = vdwg.mxu0
    %v2962 = vmax.f32 %v2939, 0.0
    %v2963 = vmax.f32 %v2941, 0.0
    %v2964 = vmax.f32 %v2944, 0.0
    %v2965 = vmax.f32 %v2946, 0.0
    %v2966 = vmax.f32 %v2949, 0.0
    %v2967 = vmax.f32 %v2951, 0.0
    %v2968 = vmax.f32 %v2954, 0.0
    %v2969 = vmax.f32 %v2956, 0.0
    %v2970 = vmax.f32 %v2959, 0.0
    %v2971 = vpack.c.bf16 %v2963, %v2962
    %v2972 = vpack.c.bf16 %v2965, %v2964
    %v2973 = vpack.c.bf16 %v2967, %v2966
    %v2974 = vpack.c.bf16 %v2969, %v2968
    %v2975 = vpack.c.bf16 %v2970, %v2970
    %v2976 = vld [vmem:[#allocation2 + $0x38c] sm:$0xf]
    %v2977 = vld [vmem:[#allocation2 + $0x39c] sm:$0xf]
    %v2978 = vld [vmem:[#allocation2 + $0x3ac] sm:$0xf]
    %v2979 = vld [vmem:[#allocation2 + $0x3bc] sm:$0xf]
    %v2980 = vld [vmem:[#allocation2 + $0x3cc] sm:$0xf]
    %v2981 = vld [vmem:[#allocation2 + $0x3dc] sm:$0xf]
    %v2982 = vld [vmem:[#allocation2 + $0x3ec] sm:$0xf]
    %v2983 = vld [vmem:[#allocation2 + $0x3fc] sm:$0xf]
    %v2984 = vld [vmem:[#allocation2 + $0x40c] sm:$0xf]
    %v2985 = vld [vmem:[#allocation2 + $0x41c] sm:$0xf]
    %v2986 = vld [vmem:[#allocation2 + $0x42c] sm:$0xf]
    %v2987 = vld [vmem:[#allocation2 + $0x43c] sm:$0xf]
    %v2988 = vld [vmem:[#allocation2 + $0x44c] sm:$0xf]
    %v2989 = vld [vmem:[#allocation2 + $0x45c] sm:$0xf]
    %v2990 = vld [vmem:[#allocation2 + $0x46c] sm:$0xf]
    %v2991 = vld [vmem:[#allocation2 + $0x47c] sm:$0xf]
    %v3008 = vunpack.c.l.b16 %v2976
    %v3009 = vunpack.c.l.b16 %v2977
    %v3010 = vunpack.c.l.b16 %v2978
    %v3011 = vunpack.c.l.b16 %v2979
    %v3012 = vunpack.c.l.b16 %v2980
    %v3013 = vunpack.c.l.b16 %v2981
    %v3014 = vunpack.c.l.b16 %v2982
    %v3015 = vunpack.c.l.b16 %v2983
    %v3016 = vunpack.c.l.b16 %v2984
    %v3017 = vunpack.c.l.b16 %v2985
    %v3018 = vunpack.c.l.b16 %v2986
    %v3019 = vunpack.c.l.b16 %v2987
    %v3020 = vunpack.c.l.b16 %v2988
    %v3021 = vunpack.c.l.b16 %v2989
    %v3022 = vunpack.c.l.b16 %v2990
    %v3023 = vunpack.c.l.b16 %v2991
    %v3024 = vpack.c.b16 %v3009, %v3008
    %v3025 = vpack.c.b16 %v3011, %v3010
    %v3026 = vpack.c.b16 %v3013, %v3012
    %v3027 = vpack.c.b16 %v3015, %v3014
    %v3028 = vpack.c.b16 %v3017, %v3016
    %v3029 = vpack.c.b16 %v3019, %v3018
    %v3030 = vpack.c.b16 %v3021, %v3020
    %v3031 = vpack.c.b16 %v3023, %v3022
    %3040 = vmatpush.bf16.msra.mxu0 %v3031
    %3041 = vmatpush.bf16.msra.mxu0 %v3030
    %3042 = vmatpush.bf16.msra.mxu0 %v3029
    %3043 = vmatpush.bf16.msra.mxu0 %v3028
    %3044 = vmatpush.bf16.msra.mxu0 %v3027
    %3045 = vmatpush.bf16.msra.mxu0 %v3026
    %3046 = vmatpush.bf16.msra.mxu0 %v3025
    %3047 = vmatpush.bf16.msra.mxu0 %v3024
    %3048 = vmatmul.bf16.gmra.mxu0 %v2971
    %v3049 = vpop.f32.mrf.mxu0
    %v3050 = vadd.f32 0.0, %v3049
    %v3051 = vpop.f32.mrf.mxu0
    %v3052 = vadd.f32 0.0, %v3051
    %3053 = vmatmul.bf16.gmra.mxu0 %v2972
    %v3054 = vpop.f32.mrf.mxu0
    %v3055 = vadd.f32 0.0, %v3054
    %v3056 = vpop.f32.mrf.mxu0
    %v3057 = vadd.f32 0.0, %v3056
    %3058 = vmatmul.bf16.gmra.mxu0 %v2973
    %v3059 = vpop.f32.mrf.mxu0
    %v3060 = vadd.f32 0.0, %v3059
    %v3061 = vpop.f32.mrf.mxu0
    %v3062 = vadd.f32 0.0, %v3061
    %3063 = vmatmul.bf16.gmra.mxu0 %v2974
    %v3064 = vpop.f32.mrf.mxu0
    %v3065 = vadd.f32 0.0, %v3064
    %v3066 = vpop.f32.mrf.mxu0
    %v3067 = vadd.f32 0.0, %v3066
    %3068 = vmatmul.bf16.gmra.mxu0 %v2975
    %v3069 = vpop.f32.mrf.mxu0
    %v3070 = vadd.f32 0.0, %v3069
    %v3071 = vpop.f32.mrf.mxu0
    %3072 = vdwg.mxu0
    %v3073 = vpack.c.bf16 %v3052, %v3050
    %v3074 = vpack.c.bf16 %v3057, %v3055
    %v3075 = vpack.c.bf16 %v3062, %v3060
    %v3076 = vpack.c.bf16 %v3067, %v3065
    %v3077 = vpack.c.bf16 %v3070, %v3070
    %v3078 = vld [vmem:[%s3 + $0xa] sm:$0x1]
    %v3080 = vperm.slane %v3078, 0
    %v3083 = vsel %vm110, %v3077, 0
    %3085 = vmatpush.bf16.msra.mxu0 0
    %3086 = vmatpush.bf16.msra.mxu0 0
    %3087 = vmatpush.bf16.msra.mxu0 0
    %3088 = vmatpush.bf16.msra.mxu0 %v3083
    %3089 = vmatpush.bf16.msra.mxu0 %v3076
    %3090 = vmatpush.bf16.msra.mxu0 %v3075
    %3091 = vmatpush.bf16.msra.mxu0 %v3074
    %3092 = vmatpush.bf16.msra.mxu0 %v3073
    %3093 = vmatmul.bf16.gmra.mxu0 %v96
    %v3094 = vpop.f32.mrf.mxu0
    %v3095 = vadd.f32 %v3080, %v3094
    %v3096 = vpop.f32.mrf.mxu0
    %v3097 = vadd.f32 %v3080, %v3096
    %3098 = vmatmul.bf16.gmra.mxu0 %v99
    %v3099 = vpop.f32.mrf.mxu0
    %v3100 = vadd.f32 %v3080, %v3099
    %v3101 = vpop.f32.mrf.mxu0
    %v3102 = vadd.f32 %v3080, %v3101
    %3103 = vmatmul.bf16.gmra.mxu0 %v102
    %v3104 = vpop.f32.mrf.mxu0
    %v3105 = vadd.f32 %v3080, %v3104
    %v3106 = vpop.f32.mrf.mxu0
    %v3107 = vadd.f32 %v3080, %v3106
    %3108 = vmatmul.bf16.gmra.mxu0 %v105
    %v3109 = vpop.f32.mrf.mxu0
    %v3110 = vadd.f32 %v3080, %v3109
    %v3111 = vpop.f32.mrf.mxu0
    %v3112 = vadd.f32 %v3080, %v3111
    %3113 = vmatmul.bf16.gmra.mxu0 %v108
    %v3114 = vpop.f32.mrf.mxu0
    %v3115 = vadd.f32 %v3080, %v3114
    %v3116 = vpop.f32.mrf.mxu0
    %3117 = vdwg.mxu0
    %v3118 = vxor.u32 %v3095, 2147483648
    %v3119 = vxor.u32 %v3097, 2147483648
    %v3120 = vxor.u32 %v3100, 2147483648
    %v3121 = vxor.u32 %v3102, 2147483648
    %v3122 = vxor.u32 %v3105, 2147483648
    %v3123 = vxor.u32 %v3107, 2147483648
    %v3124 = vxor.u32 %v3110, 2147483648
    %v3125 = vxor.u32 %v3112, 2147483648
    %v3126 = vxor.u32 %v3115, 2147483648
    %v3127 = vmul.f32 %v3118, 1.442695
    %v3128 = vpow.pop %v3127
    %v3129 = vmul.f32 %v3119, 1.442695
    %v3130 = vpow.pop %v3129
    %v3131 = vmul.f32 %v3120, 1.442695
    %v3132 = vpow.pop %v3131
    %v3133 = vmul.f32 %v3121, 1.442695
    %v3134 = vpow.pop %v3133
    %v3135 = vmul.f32 %v3122, 1.442695
    %v3136 = vpow.pop %v3135
    %v3137 = vmul.f32 %v3123, 1.442695
    %v3138 = vpow.pop %v3137
    %v3139 = vmul.f32 %v3124, 1.442695
    %v3140 = vpow.pop %v3139
    %v3141 = vmul.f32 %v3125, 1.442695
    %v3142 = vpow.pop %v3141
    %v3143 = vmul.f32 %v3126, 1.442695
    %v3144 = vpow.pop %v3143
    %v3145 = vadd.f32 %v3128, 1.0
    %v3146 = vadd.f32 %v3130, 1.0
    %v3147 = vadd.f32 %v3132, 1.0
    %v3148 = vadd.f32 %v3134, 1.0
    %v3149 = vadd.f32 %v3136, 1.0
    %v3150 = vadd.f32 %v3138, 1.0
    %v3151 = vadd.f32 %v3140, 1.0
    %v3152 = vadd.f32 %v3142, 1.0
    %v3153 = vadd.f32 %v3144, 1.0
    %v3154 = vrcp.pop %v3145
    %v3155 = vmul.f32 %v3145, %v3154
    %v3156 = vsub.f32 1.0, %v3155
    %v3157 = vmul.f32 %v3154, %v3156
    %v3158 = vadd.f32 %v3154, %v3157
    %vm3159 = vweird.f32 %v3145
    %vm3160 = vweird.f32 %v3154
    %vm3161 = vmor %vm3159, %vm3160
    %v3162 = vsel %vm3161, %v3154, %v3158
    %v3163 = vand.u32 2147483647, %v3145
    %vm3164 = vcmp.eq.f32.partialorder %v3163, 8.507059e+37
    %v3165 = vand.u32 %v3145, 2147483648
    %v3166 = vor.u32 1.1754944e-38, %v3165
    %v3167 = vsel %vm3164, %v3166, %v3162
    %v3168 = vmul.f32 1.0, %v3167
    %v3169 = vrcp.pop %v3146
    %v3170 = vmul.f32 %v3146, %v3169
    %v3171 = vsub.f32 1.0, %v3170
    %v3172 = vmul.f32 %v3169, %v3171
    %v3173 = vadd.f32 %v3169, %v3172
    %vm3174 = vweird.f32 %v3146
    %vm3175 = vweird.f32 %v3169
    %vm3176 = vmor %vm3174, %vm3175
    %v3177 = vsel %vm3176, %v3169, %v3173
    %v3178 = vand.u32 2147483647, %v3146
    %vm3179 = vcmp.eq.f32.partialorder %v3178, 8.507059e+37
    %v3180 = vand.u32 %v3146, 2147483648
    %v3181 = vor.u32 1.1754944e-38, %v3180
    %v3182 = vsel %vm3179, %v3181, %v3177
    %v3183 = vmul.f32 1.0, %v3182
    %v3184 = vrcp.pop %v3147
    %v3185 = vmul.f32 %v3147, %v3184
    %v3186 = vsub.f32 1.0, %v3185
    %v3187 = vmul.f32 %v3184, %v3186
    %v3188 = vadd.f32 %v3184, %v3187
    %vm3189 = vweird.f32 %v3147
    %vm3190 = vweird.f32 %v3184
    %vm3191 = vmor %vm3189, %vm3190
    %v3192 = vsel %vm3191, %v3184, %v3188
    %v3193 = vand.u32 2147483647, %v3147
    %vm3194 = vcmp.eq.f32.partialorder %v3193, 8.507059e+37
    %v3195 = vand.u32 %v3147, 2147483648
    %v3196 = vor.u32 1.1754944e-38, %v3195
    %v3197 = vsel %vm3194, %v3196, %v3192
    %v3198 = vmul.f32 1.0, %v3197
    %v3199 = vrcp.pop %v3148
    %v3200 = vmul.f32 %v3148, %v3199
    %v3201 = vsub.f32 1.0, %v3200
    %v3202 = vmul.f32 %v3199, %v3201
    %v3203 = vadd.f32 %v3199, %v3202
    %vm3204 = vweird.f32 %v3148
    %vm3205 = vweird.f32 %v3199
    %vm3206 = vmor %vm3204, %vm3205
    %v3207 = vsel %vm3206, %v3199, %v3203
    %v3208 = vand.u32 2147483647, %v3148
    %vm3209 = vcmp.eq.f32.partialorder %v3208, 8.507059e+37
    %v3210 = vand.u32 %v3148, 2147483648
    %v3211 = vor.u32 1.1754944e-38, %v3210
    %v3212 = vsel %vm3209, %v3211, %v3207
    %v3213 = vmul.f32 1.0, %v3212
    %v3214 = vrcp.pop %v3149
    %v3215 = vmul.f32 %v3149, %v3214
    %v3216 = vsub.f32 1.0, %v3215
    %v3217 = vmul.f32 %v3214, %v3216
    %v3218 = vadd.f32 %v3214, %v3217
    %vm3219 = vweird.f32 %v3149
    %vm3220 = vweird.f32 %v3214
    %vm3221 = vmor %vm3219, %vm3220
    %v3222 = vsel %vm3221, %v3214, %v3218
    %v3223 = vand.u32 2147483647, %v3149
    %vm3224 = vcmp.eq.f32.partialorder %v3223, 8.507059e+37
    %v3225 = vand.u32 %v3149, 2147483648
    %v3226 = vor.u32 1.1754944e-38, %v3225
    %v3227 = vsel %vm3224, %v3226, %v3222
    %v3228 = vmul.f32 1.0, %v3227
    %v3229 = vrcp.pop %v3150
    %v3230 = vmul.f32 %v3150, %v3229
    %v3231 = vsub.f32 1.0, %v3230
    %v3232 = vmul.f32 %v3229, %v3231
    %v3233 = vadd.f32 %v3229, %v3232
    %vm3234 = vweird.f32 %v3150
    %vm3235 = vweird.f32 %v3229
    %vm3236 = vmor %vm3234, %vm3235
    %v3237 = vsel %vm3236, %v3229, %v3233
    %v3238 = vand.u32 2147483647, %v3150
    %vm3239 = vcmp.eq.f32.partialorder %v3238, 8.507059e+37
    %v3240 = vand.u32 %v3150, 2147483648
    %v3241 = vor.u32 1.1754944e-38, %v3240
    %v3242 = vsel %vm3239, %v3241, %v3237
    %v3243 = vmul.f32 1.0, %v3242
    %v3244 = vrcp.pop %v3151
    %v3245 = vmul.f32 %v3151, %v3244
    %v3246 = vsub.f32 1.0, %v3245
    %v3247 = vmul.f32 %v3244, %v3246
    %v3248 = vadd.f32 %v3244, %v3247
    %vm3249 = vweird.f32 %v3151
    %vm3250 = vweird.f32 %v3244
    %vm3251 = vmor %vm3249, %vm3250
    %v3252 = vsel %vm3251, %v3244, %v3248
    %v3253 = vand.u32 2147483647, %v3151
    %vm3254 = vcmp.eq.f32.partialorder %v3253, 8.507059e+37
    %v3255 = vand.u32 %v3151, 2147483648
    %v3256 = vor.u32 1.1754944e-38, %v3255
    %v3257 = vsel %vm3254, %v3256, %v3252
    %v3258 = vmul.f32 1.0, %v3257
    %v3259 = vrcp.pop %v3152
    %v3260 = vmul.f32 %v3152, %v3259
    %v3261 = vsub.f32 1.0, %v3260
    %v3262 = vmul.f32 %v3259, %v3261
    %v3263 = vadd.f32 %v3259, %v3262
    %vm3264 = vweird.f32 %v3152
    %vm3265 = vweird.f32 %v3259
    %vm3266 = vmor %vm3264, %vm3265
    %v3267 = vsel %vm3266, %v3259, %v3263
    %v3268 = vand.u32 2147483647, %v3152
    %vm3269 = vcmp.eq.f32.partialorder %v3268, 8.507059e+37
    %v3270 = vand.u32 %v3152, 2147483648
    %v3271 = vor.u32 1.1754944e-38, %v3270
    %v3272 = vsel %vm3269, %v3271, %v3267
    %v3273 = vmul.f32 1.0, %v3272
    %v3274 = vrcp.pop %v3153
    %v3275 = vmul.f32 %v3153, %v3274
    %v3276 = vsub.f32 1.0, %v3275
    %v3277 = vmul.f32 %v3274, %v3276
    %v3278 = vadd.f32 %v3274, %v3277
    %vm3279 = vweird.f32 %v3153
    %vm3280 = vweird.f32 %v3274
    %vm3281 = vmor %vm3279, %vm3280
    %v3282 = vsel %vm3281, %v3274, %v3278
    %v3283 = vand.u32 2147483647, %v3153
    %vm3284 = vcmp.eq.f32.partialorder %v3283, 8.507059e+37
    %v3285 = vand.u32 %v3153, 2147483648
    %v3286 = vor.u32 1.1754944e-38, %v3285
    %v3287 = vsel %vm3284, %v3286, %v3282
    %v3288 = vmul.f32 1.0, %v3287
    %3289 = vst.msk [vmem:[%s6] sm:$0xff] %vm180, %v3168
    %3290 = vst.msk [vmem:[%s6 + $0x8] sm:$0xff] %vm180, %v3183
    %3291 = vst.msk [vmem:[%s6 + $0x10] sm:$0xff] %vm180, %v3198
    %3292 = vst.msk [vmem:[%s6 + $0x18] sm:$0xff] %vm180, %v3213
    %3293 = vst.msk [vmem:[%s6 + $0x20] sm:$0xff] %vm180, %v3228
    %3294 = vst.msk [vmem:[%s6 + $0x28] sm:$0xff] %vm180, %v3243
    %3295 = vst.msk [vmem:[%s6 + $0x30] sm:$0xff] %vm180, %v3258
    %3296 = vst.msk [vmem:[%s6 + $0x38] sm:$0xff] %vm180, %v3273
    %vm3297 = vcmask 517120
    %3298 = vst.msk [vmem:[%s6 + $0x40] sm:$0x3] %vm3297, %v3288
    // Predicated region
    $region30: #{tpu_custom_call.1} parent=1 // pred_check
      _
    $region31: #{tpu_custom_call.1} parent=1 // pred_check_branch
      %3300 = sbr.rel (0) target = $region33
    $region32: #{tpu_custom_call.1} parent=1 // pred_region
      _
    $region33: #{tpu_custom_call.1} parent=1 // pred_fallthru
      _
    // Predicated region
    $region34: #{tpu_custom_call.1} parent=1 // pred_check
      _
    $region35: #{tpu_custom_call.1} parent=1 // pred_check_branch
      %3302 = sbr.rel (0) target = $region37
    $region36: #{tpu_custom_call.1} parent=1 // pred_region
      _
    $region37: #{tpu_custom_call.1} parent=1 // pred_fallthru
      _
    %3303 = vsyncpa [#allocation3], 1

</llo_original>
